<compile_context>
chip_gen: v6e
topology: v6e:2x2x1
jax: 0.10.0
libtpu: 0.0.40
codegen_flags: <defaults>
</compile_context>

<pallas_src>
import functools

import jax
import jax.numpy as jnp
from jax import lax
from jax.experimental import pallas as pl
from jax.experimental.pallas import tpu as pltpu


def _resblock_kernel(xc_ref, xprev_ref, xnext_ref, w1_ref, w2_ref, vec_ref,
                     o_ref, *, seq_len):
    """One (batch, L-tile) grid step.

    xc_ref    : (1, TL, C)   current L-tile of x (channels-last)
    xprev_ref : (1, 8, C)    8 rows ending at the tile start (clamped at j=0)
    xnext_ref : (1, 8, C)    8 rows starting right after the tile (clamped)
    w1_ref    : (3, C, C)    conv1 taps (k, Cin, Cout), BN1 scale folded in
    w2_ref    : (3, C, C)    conv2 taps (k, Cin, Cout), BN2 scale folded in
    vec_ref   : (3, C)       row0 = conv1 bias+BN1 shift, row1 = PReLU slope,
                             row2 = conv2 bias+BN2 shift
    o_ref     : (1, TL, C)
    seq_len   : true sequence length L (static; tiles may overrun it)
    """
    TL, C = o_ref.shape[1], o_ref.shape[2]
    j = pl.program_id(1)
    base = j * TL                          # global row index of o_ref[0, 0]
    mm_dtype = w1_ref.dtype

    x_nat = xc_ref[0]                      # (TL, C) native dtype
    x_res = x_nat.astype(jnp.float32)      # residual path stays f32
    xw = x_nat.astype(mm_dtype)            # conv/window path in matmul dtype

    # Tail rows (global pos >= seq_len) only exist when TL does not divide L;
    # their VMEM content is garbage from the clamped DMA, zero them for conv1.
    if seq_len % TL != 0:
        pos = base + lax.broadcasted_iota(jnp.int32, (TL, 1), 0)
        xw = jnp.where(pos < seq_len, xw, 0.0)

    vec = vec_ref[...].astype(jnp.float32)                   # (3, C)
    shift1, alpha, shift2 = vec[0:1], vec[1:2], vec[2:3]     # each (1, C)

    # ---- 2-row halos; rows outside [0, seq_len) are conv1's zero padding ----
    prev2 = xprev_ref[0, 6:8, :].astype(mm_dtype)            # rows base-2/-1
    next2 = xnext_ref[0, 0:2, :].astype(mm_dtype)            # rows base+TL/+TL+1
    ppos = base - 2 + lax.broadcasted_iota(jnp.int32, (2, 1), 0)
    npos = base + TL + lax.broadcasted_iota(jnp.int32, (2, 1), 0)
    prev2 = jnp.where(ppos >= 0, prev2, 0.0)
    next2 = jnp.where(npos < seq_len, next2, 0.0)

    # x window covering global rows base-2 .. base+TL+1, in matmul dtype.
    xh = jnp.concatenate([prev2, xw, next2], axis=0)         # (TL+4, C)

    # ---- conv1 (k=3, pad=1) + bias + BN1: per-tap MXU dots, f32 accumulate.
    # Computed for rows base-1 .. base+TL (the window conv2 needs).
    f1 = jnp.dot(xh[0:TL + 2], w1_ref[0], preferred_element_type=jnp.float32)
    f1 += jnp.dot(xh[1:TL + 3], w1_ref[1], preferred_element_type=jnp.float32)
    f1 += jnp.dot(xh[2:TL + 4], w1_ref[2], preferred_element_type=jnp.float32)
    f1 = f1 + shift1
    f1 = jnp.where(f1 >= 0, f1, alpha * f1)                  # PReLU
    # conv2 zero-pads feat1 at global rows -1 and seq_len (and tail rows).
    # (Gating this mask on boundary tiles only is a ~1-3% VALU win; kept
    #  unconditional for robustness — it is tiny relative to the MXU work.)
    fpos = base - 1 + lax.broadcasted_iota(jnp.int32, (TL + 2, 1), 0)
    f1 = jnp.where((fpos >= 0) & (fpos < seq_len), f1, 0.0)
    f1 = f1.astype(mm_dtype)

    # ---- conv2 (k=3, pad=1) + bias + BN2: per-tap MXU dots ----
    y = jnp.dot(f1[0:TL], w2_ref[0], preferred_element_type=jnp.float32)
    y += jnp.dot(f1[1:TL + 1], w2_ref[1], preferred_element_type=jnp.float32)
    y += jnp.dot(f1[2:TL + 2], w2_ref[2], preferred_element_type=jnp.float32)
    y = y + shift2

    # ---- residual add + RReLU (eval slope = (1/8 + 1/3)/2 = 11/48) ----
    r = x_res + y
    slope = (1.0 / 8.0 + 1.0 / 3.0) / 2.0
    o_ref[0] = jnp.where(r >= 0, r, slope * r).astype(o_ref.dtype)


def _choose_tile(L, tl_max):
    """Tile length: exact divisor near tl_max if one exists, else tl_max
    (the kernel masks the tail of the last tile)."""
    tl_max = max(8, (tl_max // 8) * 8)
    if L <= tl_max:
        return L
    for tl in range(tl_max, tl_max // 2 - 1, -8):
        if L % tl == 0:
            return tl
    return tl_max


def _vmem_limit_bytes():
    """Scoped-VMEM request with headroom below physical (v7x has 64 MiB)."""
    cap = 64 * 1024 * 1024
    try:
        cap = int(pltpu.get_tpu_info().vmem_capacity_bytes)
    except Exception:
        pass
    return max(32 * 1024 * 1024, min(cap - 16 * 1024 * 1024, 64 * 1024 * 1024))


def resblock1d_forward_nlc(x_nlc, params, *, eps=1e-5, tl_max=512,
                           matmul_dtype=jnp.bfloat16):
    """ResBlock1D forward on channels-last input (N, L, C).

    Preferred entry point: no layout transposes, no wrapper-side padding.
    Constraint: L must be a multiple of 8 (sublane granularity of the halo
    blocks).  L does NOT need to divide the tile length.
    """
    N, L, C = x_nlc.shape
    if L < 8 or L % 8 != 0:
        raise ValueError("L must be a multiple of 8 (pad the sequence).")
    if C >= 512 and matmul_dtype == jnp.float32:
        tl_max = min(tl_max, 256)          # v7x 64 MiB VMEM headroom for f32

    TL = _choose_tile(L, tl_max)
    T = -(-L // TL)
    if N * T < 2 and L >= 16:
        # Keep >= 2 parallel grid steps so a 2-TC chip (v7x) uses both cores.
        TL = max(8, ((L // 2) // 8) * 8)
        T = -(-L // TL)
    hb = TL // 8            # 8-row blocks per L-tile
    nhb = L // 8            # 8-row blocks in the whole sequence

    # ---- fold conv bias + BatchNorm (running stats) into weights/shift ----
    def fold(w, b, g, beta, rm, rv):
        s = g / jnp.sqrt(rv + eps)                                   # (Cout,)
        # Conv1d weight (Cout, Cin, K) -> (K, Cin, Cout), scaled per Cout.
        wk = jnp.transpose(w, (2, 1, 0)) * s[None, None, :]
        shift = b * s + beta - rm * s
        return wk.astype(matmul_dtype), shift.astype(jnp.float32)

    w1s, t1 = fold(params["w1"], params["b1"], params["g1"],
                   params["beta1"], params["rm1"], params["rv1"])
    w2s, t2 = fold(params["w2"], params["b2"], params["g2"],
                   params["beta2"], params["rm2"], params["rv2"])
    a1 = jnp.broadcast_to(jnp.ravel(params["prelu_a"]).astype(jnp.float32),
                          (C,))
    vec = jnp.stack([t1, a1, t2], axis=0)                            # (3, C)

    in_specs = [
        pl.BlockSpec((1, TL, C), lambda n, j: (n, j, 0)),            # tile
        pl.BlockSpec((1, 8, C),                                      # prev halo
                     lambda n, j: (n, jnp.maximum(j * hb - 1, 0), 0)),
        pl.BlockSpec((1, 8, C),                                      # next halo
                     lambda n, j: (n, jnp.minimum((j + 1) * hb, nhb - 1), 0)),
        pl.BlockSpec((3, C, C), lambda n, j: (0, 0, 0)),             # w1 taps
        pl.BlockSpec((3, C, C), lambda n, j: (0, 0, 0)),             # w2 taps
        pl.BlockSpec((3, C), lambda n, j: (0, 0)),                   # shifts
    ]
    out_specs = pl.BlockSpec((1, TL, C), lambda n, j: (n, j, 0))

    x_item = jnp.dtype(x_nlc.dtype).itemsize
    w_item = jnp.dtype(matmul_dtype).itemsize
    cost = pl.CostEstimate(
        flops=2 * 2 * N * L * (3 * C) * C,                 # two k=3 convs
        transcendentals=0,
        bytes_accessed=2 * N * L * C * x_item + 2 * 3 * C * C * w_item)

    kernel = functools.partial(_resblock_kernel, seq_len=L)
    return pl.pallas_call(
        kernel,
        out_shape=jax.ShapeDtypeStruct((N, L, C), x_nlc.dtype),
        grid_spec=pltpu.PrefetchScalarGridSpec(
            num_scalar_prefetch=0,
            grid=(N, T),
            in_specs=in_specs,
            out_specs=out_specs),
        compiler_params=pltpu.CompilerParams(
            dimension_semantics=("parallel", "parallel"),
            vmem_limit_bytes=_vmem_limit_bytes()),
        cost_estimate=cost,
    )(x_nlc, x_nlc, x_nlc, w1s, w2s, vec)


def resblock1d_forward(x_ncl, params, **kw):
    """Drop-in wrapper for the PyTorch NCL layout (N, C, L).

    If the surrounding model can keep activations channels-last, call
    resblock1d_forward_nlc directly and skip both transposes.
    """
    y = resblock1d_forward_nlc(jnp.transpose(x_ncl, (0, 2, 1)), params, **kw)
    return jnp.transpose(y, (0, 2, 1))


def resblock1d_ref(x_ncl, params, eps=1e-5):
    """Pure-JAX reference mirroring the PyTorch forward (eval mode)."""
    def convbn(x, w, b, g, beta, rm, rv):
        y = lax.conv_general_dilated(
            x, w, window_strides=(1,), padding=((1, 1),),
            dimension_numbers=("NCH", "OIH", "NCH"),
            precision=lax.Precision.HIGHEST)
        y = y + b[None, :, None]
        y = (y - rm[None, :, None]) / jnp.sqrt(rv[None, :, None] + eps)
        return y * g[None, :, None] + beta[None, :, None]

    f = convbn(x_ncl, params["w1"], params["b1"], params["g1"],
               params["beta1"], params["rm1"], params["rv1"])
    a = jnp.ravel(params["prelu_a"]).reshape(1, -1, 1)
    f = jnp.where(f >= 0, f, a * f)                                  # PReLU
    f = convbn(f, params["w2"], params["b2"], params["g2"],
               params["beta2"], params["rm2"], params["rv2"])
    r = x_ncl + f
    slope = (1.0 / 8.0 + 1.0 / 3.0) / 2.0
    return jnp.where(r >= 0, r, slope * r)                           # RReLU eval


def make_params(key, C, K=3):
    ks = jax.random.split(key, 12)
    return {
        "w1": 0.2 * jax.random.normal(ks[0], (C, C, K), jnp.float32),
        "b1": 0.1 * jax.random.normal(ks[1], (C,), jnp.float32),
        "g1": 1.0 + 0.1 * jax.random.normal(ks[2], (C,), jnp.float32),
        "beta1": 0.1 * jax.random.normal(ks[3], (C,), jnp.float32),
        "rm1": 0.1 * jax.random.normal(ks[4], (C,), jnp.float32),
        "rv1": jax.random.uniform(ks[5], (C,), jnp.float32, 0.5, 1.5),
        "w2": 0.2 * jax.random.normal(ks[6], (C, C, K), jnp.float32),
        "b2": 0.1 * jax.random.normal(ks[7], (C,), jnp.float32),
        "g2": 1.0 + 0.1 * jax.random.normal(ks[8], (C,), jnp.float32),
        "beta2": 0.1 * jax.random.normal(ks[9], (C,), jnp.float32),
        "rm2": 0.1 * jax.random.normal(ks[10], (C,), jnp.float32),
        "rv2": jax.random.uniform(ks[11], (C,), jnp.float32, 0.5, 1.5),
        "prelu_a": jnp.array([0.25], jnp.float32),   # nn.PReLU() default
    }


if __name__ == "__main__":
    root = jax.random.PRNGKey(0)

    def run_case(N, C, L, tl_max, atol, rtol, **fwd_kw):
        kx, kp = jax.random.split(jax.random.fold_in(root, 1000 * L + C))
        x = jax.random.normal(kx, (N, C, L), jnp.float32)    # PyTorch NCL
        params = make_params(kp, C)
        out = jax.block_until_ready(
            resblock1d_forward(x, params, tl_max=tl_max, **fwd_kw))
        ref = jax.block_until_ready(resblock1d_ref(x, params))
        assert out.shape == (N, C, L), out.shape
        err = float(jnp.max(jnp.abs(out - ref)))
        assert jnp.allclose(out, ref, atol=atol, rtol=rtol), (
            f"max abs err {err} (N={N}, C={C}, L={L}, kw={fwd_kw})")

    # f32 MXU path, multi-tile grid + halos: tight tolerance.
    run_case(N=2, C=16, L=256, tl_max=128, atol=1e-4, rtol=1e-4,
             matmul_dtype=jnp.float32)
    # f32, L not a multiple of the tile (88 rows, TL=64): tail-masking path.
    run_case(N=1, C=8, L=88, tl_max=64, atol=1e-4, rtol=1e-4,
             matmul_dtype=jnp.float32)
    # Default bf16 MXU path (v5e/v6e/v7x native rate): loose tolerance.
    run_case(N=2, C=16, L=128, tl_max=64, atol=2e-1, rtol=5e-2)
    # Single-batch tiny-L boundary/clamp path (split into 2 parallel steps).
    run_case(N=1, C=8, L=16, tl_max=512, atol=1e-4, rtol=1e-4,
             matmul_dtype=jnp.float32)

    print("KERNEL_OK")
</pallas_src>

<mosaic_0001>
module attributes {stable_mosaic.version = 11 : i64} {
  func.func @_resblock_kernel(%arg0: i32, %arg1: i32, %arg2: memref<1x128x16xf32, #tpu.memory_space<vmem>>, %arg3: memref<1x8x16xf32, #tpu.memory_space<vmem>>, %arg4: memref<1x8x16xf32, #tpu.memory_space<vmem>>, %arg5: memref<3x16x16xf32, #tpu.memory_space<vmem>>, %arg6: memref<3x16x16xf32, #tpu.memory_space<vmem>>, %arg7: memref<3x16xf32, #tpu.memory_space<vmem>>, %arg8: memref<1x128x16xf32, #tpu.memory_space<vmem>>) attributes {dimension_semantics = [#tpu.dimension_semantics<parallel>, #tpu.dimension_semantics<parallel>], iteration_bounds = array<i64: 2, 2>, scalar_prefetch = 0 : i64, scratch_operands = 0 : i64, tpu.core_type = #tpu.core_type<tc>, window_params = [{transform_indices = @transform_0, window_bounds = array<i64: 1, 128, 16>}, {transform_indices = @transform_1, window_bounds = array<i64: 1, 8, 16>}, {transform_indices = @transform_2, window_bounds = array<i64: 1, 8, 16>}, {pipeline_mode = #tpu.pipeline_mode<synchronous>, transform_indices = @transform_3, window_bounds = array<i64: 3, 16, 16>}, {pipeline_mode = #tpu.pipeline_mode<synchronous>, transform_indices = @transform_4, window_bounds = array<i64: 3, 16, 16>}, {pipeline_mode = #tpu.pipeline_mode<synchronous>, transform_indices = @transform_5, window_bounds = array<i64: 3, 16>}, {transform_indices = @transform_6, window_bounds = array<i64: 1, 128, 16>}]} {
    %c128_i32 = arith.constant 128 : i32
    %0 = arith.muli %arg1, %c128_i32 : i32
    %c0 = arith.constant 0 : index
    %c0_0 = arith.constant 0 : index
    %c0_1 = arith.constant 0 : index
    %1 = vector.load %arg2[%c0, %c0_0, %c0_1] : memref<1x128x16xf32, #tpu.memory_space<vmem>>, vector<1x128x16xf32>
    %2 = vector.shape_cast %1 : vector<1x128x16xf32> to vector<128x16xf32>
    %c0_2 = arith.constant 0 : index
    %c0_3 = arith.constant 0 : index
    %3 = vector.load %arg7[%c0_2, %c0_3] : memref<3x16xf32, #tpu.memory_space<vmem>>, vector<3x16xf32>
    %4 = vector.extract_strided_slice %3 {offsets = [0, 0], sizes = [1, 16], strides = [1, 1]} : vector<3x16xf32> to vector<1x16xf32>
    %5 = vector.extract_strided_slice %3 {offsets = [1, 0], sizes = [1, 16], strides = [1, 1]} : vector<3x16xf32> to vector<1x16xf32>
    %6 = vector.extract_strided_slice %3 {offsets = [2, 0], sizes = [1, 16], strides = [1, 1]} : vector<3x16xf32> to vector<1x16xf32>
    %c0_4 = arith.constant 0 : index
    %c6 = arith.constant 6 : index
    %c0_5 = arith.constant 0 : index
    %7 = vector.load %arg3[%c0_4, %c6, %c0_5] : memref<1x8x16xf32, #tpu.memory_space<vmem>>, vector<1x2x16xf32>
    %8 = vector.shape_cast %7 : vector<1x2x16xf32> to vector<2x16xf32>
    %c0_6 = arith.constant 0 : index
    %c0_7 = arith.constant 0 : index
    %c0_8 = arith.constant 0 : index
    %9 = vector.load %arg4[%c0_6, %c0_7, %c0_8] : memref<1x8x16xf32, #tpu.memory_space<vmem>>, vector<1x2x16xf32>
    %10 = vector.shape_cast %9 : vector<1x2x16xf32> to vector<2x16xf32>
    %c2_i32 = arith.constant 2 : i32
    %11 = arith.subi %0, %c2_i32 : i32
    %12 = tpu.iota {dimensions = array<i32: 0>} : vector<2x1xi32>
    %13 = vector.broadcast %11 : i32 to vector<2x1xi32>
    %14 = arith.addi %13, %12 : vector<2x1xi32>
    %c128_i32_9 = arith.constant 128 : i32
    %15 = arith.addi %0, %c128_i32_9 : i32
    %16 = tpu.iota {dimensions = array<i32: 0>} : vector<2x1xi32>
    %17 = vector.broadcast %15 : i32 to vector<2x1xi32>
    %18 = arith.addi %17, %16 : vector<2x1xi32>
    %c0_i32 = arith.constant 0 : i32
    %19 = vector.broadcast %c0_i32 : i32 to vector<2x1xi32>
    %20 = arith.cmpi sge, %14, %19 : vector<2x1xi32>
    %cst = arith.constant 0.000000e+00 : f32
    %21 = vector.shape_cast %20 : vector<2x1xi1> to vector<2x1xi1>
    %22 = vector.broadcast %21 : vector<2x1xi1> to vector<2x16xi1>
    %23 = vector.broadcast %cst : f32 to vector<2x16xf32>
    %24 = arith.select %22, %8, %23 : vector<2x16xi1>, vector<2x16xf32>
    %c256_i32 = arith.constant 256 : i32
    %25 = vector.broadcast %c256_i32 : i32 to vector<2x1xi32>
    %26 = arith.cmpi slt, %18, %25 : vector<2x1xi32>
    %cst_10 = arith.constant 0.000000e+00 : f32
    %27 = vector.shape_cast %26 : vector<2x1xi1> to vector<2x1xi1>
    %28 = vector.broadcast %27 : vector<2x1xi1> to vector<2x16xi1>
    %29 = vector.broadcast %cst_10 : f32 to vector<2x16xf32>
    %30 = arith.select %28, %10, %29 : vector<2x16xi1>, vector<2x16xf32>
    %31 = tpu.concatenate %24, %2, %30 in 0 : vector<2x16xf32>, vector<128x16xf32>, vector<2x16xf32> -> vector<132x16xf32>
    %32 = vector.extract_strided_slice %31 {offsets = [0, 0], sizes = [130, 16], strides = [1, 1]} : vector<132x16xf32> to vector<130x16xf32>
    %c0_11 = arith.constant 0 : index
    %c0_12 = arith.constant 0 : index
    %c0_13 = arith.constant 0 : index
    %33 = vector.load %arg5[%c0_11, %c0_12, %c0_13] : memref<3x16x16xf32, #tpu.memory_space<vmem>>, vector<1x16x16xf32>
    %34 = vector.shape_cast %33 : vector<1x16x16xf32> to vector<16x16xf32>
    %cst_14 = arith.constant dense<0.000000e+00> : vector<130x16xf32>
    %35 = tpu.matmul %32, %34, %cst_14 {dimension_numbers = #tpu.dot_dimension_numbers<[1], [0], [0], [1], [0, 0, 1, 1], [], []>} : vector<130x16xf32>, vector<16x16xf32>, vector<130x16xf32> -> vector<130x16xf32>
    %36 = vector.extract_strided_slice %31 {offsets = [1, 0], sizes = [130, 16], strides = [1, 1]} : vector<132x16xf32> to vector<130x16xf32>
    %c1 = arith.constant 1 : index
    %c0_15 = arith.constant 0 : index
    %c0_16 = arith.constant 0 : index
    %37 = vector.load %arg5[%c1, %c0_15, %c0_16] : memref<3x16x16xf32, #tpu.memory_space<vmem>>, vector<1x16x16xf32>
    %38 = vector.shape_cast %37 : vector<1x16x16xf32> to vector<16x16xf32>
    %cst_17 = arith.constant dense<0.000000e+00> : vector<130x16xf32>
    %39 = tpu.matmul %36, %38, %cst_17 {dimension_numbers = #tpu.dot_dimension_numbers<[1], [0], [0], [1], [0, 0, 1, 1], [], []>} : vector<130x16xf32>, vector<16x16xf32>, vector<130x16xf32> -> vector<130x16xf32>
    %40 = arith.addf %35, %39 : vector<130x16xf32>
    %41 = vector.extract_strided_slice %31 {offsets = [2, 0], sizes = [130, 16], strides = [1, 1]} : vector<132x16xf32> to vector<130x16xf32>
    %c2 = arith.constant 2 : index
    %c0_18 = arith.constant 0 : index
    %c0_19 = arith.constant 0 : index
    %42 = vector.load %arg5[%c2, %c0_18, %c0_19] : memref<3x16x16xf32, #tpu.memory_space<vmem>>, vector<1x16x16xf32>
    %43 = vector.shape_cast %42 : vector<1x16x16xf32> to vector<16x16xf32>
    %cst_20 = arith.constant dense<0.000000e+00> : vector<130x16xf32>
    %44 = tpu.matmul %41, %43, %cst_20 {dimension_numbers = #tpu.dot_dimension_numbers<[1], [0], [0], [1], [0, 0, 1, 1], [], []>} : vector<130x16xf32>, vector<16x16xf32>, vector<130x16xf32> -> vector<130x16xf32>
    %45 = arith.addf %40, %44 : vector<130x16xf32>
    %46 = vector.broadcast %4 : vector<1x16xf32> to vector<130x16xf32>
    %47 = arith.addf %45, %46 : vector<130x16xf32>
    %cst_21 = arith.constant 0.000000e+00 : f32
    %48 = vector.broadcast %cst_21 : f32 to vector<130x16xf32>
    %49 = arith.cmpf oge, %47, %48 : vector<130x16xf32>
    %50 = vector.broadcast %5 : vector<1x16xf32> to vector<130x16xf32>
    %51 = arith.mulf %50, %47 : vector<130x16xf32>
    %52 = arith.select %49, %47, %51 : vector<130x16xi1>, vector<130x16xf32>
    %c1_i32 = arith.constant 1 : i32
    %53 = arith.subi %0, %c1_i32 : i32
    %54 = tpu.iota {dimensions = array<i32: 0>} : vector<130x1xi32>
    %55 = vector.broadcast %53 : i32 to vector<130x1xi32>
    %56 = arith.addi %55, %54 : vector<130x1xi32>
    %c0_i32_22 = arith.constant 0 : i32
    %57 = vector.broadcast %c0_i32_22 : i32 to vector<130x1xi32>
    %58 = arith.cmpi sge, %56, %57 : vector<130x1xi32>
    %c256_i32_23 = arith.constant 256 : i32
    %59 = vector.broadcast %c256_i32_23 : i32 to vector<130x1xi32>
    %60 = arith.cmpi slt, %56, %59 : vector<130x1xi32>
    %61 = arith.andi %58, %60 : vector<130x1xi1>
    %cst_24 = arith.constant 0.000000e+00 : f32
    %62 = vector.shape_cast %61 : vector<130x1xi1> to vector<130x1xi1>
    %63 = vector.broadcast %62 : vector<130x1xi1> to vector<130x16xi1>
    %64 = vector.broadcast %cst_24 : f32 to vector<130x16xf32>
    %65 = arith.select %63, %52, %64 : vector<130x16xi1>, vector<130x16xf32>
    %66 = vector.extract_strided_slice %65 {offsets = [0, 0], sizes = [128, 16], strides = [1, 1]} : vector<130x16xf32> to vector<128x16xf32>
    %c0_25 = arith.constant 0 : index
    %c0_26 = arith.constant 0 : index
    %c0_27 = arith.constant 0 : index
    %67 = vector.load %arg6[%c0_25, %c0_26, %c0_27] : memref<3x16x16xf32, #tpu.memory_space<vmem>>, vector<1x16x16xf32>
    %68 = vector.shape_cast %67 : vector<1x16x16xf32> to vector<16x16xf32>
    %cst_28 = arith.constant dense<0.000000e+00> : vector<128x16xf32>
    %69 = tpu.matmul %66, %68, %cst_28 {dimension_numbers = #tpu.dot_dimension_numbers<[1], [0], [0], [1], [0, 0, 1, 1], [], []>} : vector<128x16xf32>, vector<16x16xf32>, vector<128x16xf32> -> vector<128x16xf32>
    %70 = vector.extract_strided_slice %65 {offsets = [1, 0], sizes = [128, 16], strides = [1, 1]} : vector<130x16xf32> to vector<128x16xf32>
    %c1_29 = arith.constant 1 : index
    %c0_30 = arith.constant 0 : index
    %c0_31 = arith.constant 0 : index
    %71 = vector.load %arg6[%c1_29, %c0_30, %c0_31] : memref<3x16x16xf32, #tpu.memory_space<vmem>>, vector<1x16x16xf32>
    %72 = vector.shape_cast %71 : vector<1x16x16xf32> to vector<16x16xf32>
    %cst_32 = arith.constant dense<0.000000e+00> : vector<128x16xf32>
    %73 = tpu.matmul %70, %72, %cst_32 {dimension_numbers = #tpu.dot_dimension_numbers<[1], [0], [0], [1], [0, 0, 1, 1], [], []>} : vector<128x16xf32>, vector<16x16xf32>, vector<128x16xf32> -> vector<128x16xf32>
    %74 = arith.addf %69, %73 : vector<128x16xf32>
    %75 = vector.extract_strided_slice %65 {offsets = [2, 0], sizes = [128, 16], strides = [1, 1]} : vector<130x16xf32> to vector<128x16xf32>
    %c2_33 = arith.constant 2 : index
    %c0_34 = arith.constant 0 : index
    %c0_35 = arith.constant 0 : index
    %76 = vector.load %arg6[%c2_33, %c0_34, %c0_35] : memref<3x16x16xf32, #tpu.memory_space<vmem>>, vector<1x16x16xf32>
    %77 = vector.shape_cast %76 : vector<1x16x16xf32> to vector<16x16xf32>
    %cst_36 = arith.constant dense<0.000000e+00> : vector<128x16xf32>
    %78 = tpu.matmul %75, %77, %cst_36 {dimension_numbers = #tpu.dot_dimension_numbers<[1], [0], [0], [1], [0, 0, 1, 1], [], []>} : vector<128x16xf32>, vector<16x16xf32>, vector<128x16xf32> -> vector<128x16xf32>
    %79 = arith.addf %74, %78 : vector<128x16xf32>
    %80 = vector.broadcast %6 : vector<1x16xf32> to vector<128x16xf32>
    %81 = arith.addf %79, %80 : vector<128x16xf32>
    %82 = arith.addf %2, %81 : vector<128x16xf32>
    %cst_37 = arith.constant 0.000000e+00 : f32
    %83 = vector.broadcast %cst_37 : f32 to vector<128x16xf32>
    %84 = arith.cmpf oge, %82, %83 : vector<128x16xf32>
    %cst_38 = arith.constant 0.229166672 : f32
    %85 = vector.broadcast %cst_38 : f32 to vector<128x16xf32>
    %86 = arith.mulf %85, %82 : vector<128x16xf32>
    %87 = arith.select %84, %82, %86 : vector<128x16xi1>, vector<128x16xf32>
    %c0_39 = arith.constant 0 : index
    %c0_40 = arith.constant 0 : index
    %c0_41 = arith.constant 0 : index
    %88 = vector.load %arg8[%c0_39, %c0_40, %c0_41] : memref<1x128x16xf32, #tpu.memory_space<vmem>>, vector<1x128x16xf32>
    %89 = vector.shape_cast %88 : vector<1x128x16xf32> to vector<128x16xf32>
    %90 = vector.shape_cast %87 : vector<128x16xf32> to vector<1x128x16xf32>
    tpu.vector_store %arg8[%c0_39, %c0_40, %c0_41], %90 {strides = array<i32>} : memref<1x128x16xf32, #tpu.memory_space<vmem>>, vector<1x128x16xf32>,
    return
  }
  func.func @transform_0(%arg0: i32, %arg1: i32) -> (i32, i32, i32) {
    %c0_i32 = arith.constant 0 : i32
    %c0_i32_0 = arith.constant 0 : i32
    return %arg0, %arg1, %c0_i32 : i32, i32, i32
  }
  func.func @transform_1(%arg0: i32, %arg1: i32) -> (i32, i32, i32) {
    %c16_i32 = arith.constant 16 : i32
    %0 = arith.muli %arg1, %c16_i32 : i32
    %c1_i32 = arith.constant 1 : i32
    %1 = arith.subi %0, %c1_i32 : i32
    %c0_i32 = arith.constant 0 : i32
    %2 = arith.maxsi %1, %c0_i32 : i32
    %c0_i32_0 = arith.constant 0 : i32
    %c0_i32_1 = arith.constant 0 : i32
    return %arg0, %2, %c0_i32_0 : i32, i32, i32
  }
  func.func @transform_2(%arg0: i32, %arg1: i32) -> (i32, i32, i32) {
    %c1_i32 = arith.constant 1 : i32
    %0 = arith.addi %arg1, %c1_i32 : i32
    %c16_i32 = arith.constant 16 : i32
    %1 = arith.muli %0, %c16_i32 : i32
    %c31_i32 = arith.constant 31 : i32
    %2 = arith.minsi %1, %c31_i32 : i32
    %c0_i32 = arith.constant 0 : i32
    %c0_i32_0 = arith.constant 0 : i32
    return %arg0, %2, %c0_i32 : i32, i32, i32
  }
  func.func @transform_3(%arg0: i32, %arg1: i32) -> (i32, i32, i32) {
    %c0_i32 = arith.constant 0 : i32
    %c0_i32_0 = arith.constant 0 : i32
    %c0_i32_1 = arith.constant 0 : i32
    %c0_i32_2 = arith.constant 0 : i32
    return %c0_i32, %c0_i32_0, %c0_i32_1 : i32, i32, i32
  }
  func.func @transform_4(%arg0: i32, %arg1: i32) -> (i32, i32, i32) {
    %c0_i32 = arith.constant 0 : i32
    %c0_i32_0 = arith.constant 0 : i32
    %c0_i32_1 = arith.constant 0 : i32
    %c0_i32_2 = arith.constant 0 : i32
    return %c0_i32, %c0_i32_0, %c0_i32_1 : i32, i32, i32
  }
  func.func @transform_5(%arg0: i32, %arg1: i32) -> (i32, i32) {
    %c0_i32 = arith.constant 0 : i32
    %c0_i32_0 = arith.constant 0 : i32
    %c0_i32_1 = arith.constant 0 : i32
    return %c0_i32, %c0_i32_0 : i32, i32
  }
  func.func @transform_6(%arg0: i32, %arg1: i32) -> (i32, i32, i32) {
    %c0_i32 = arith.constant 0 : i32
    %c0_i32_0 = arith.constant 0 : i32
    return %arg0, %arg1, %c0_i32 : i32, i32, i32
  }
}

</mosaic_0001>

<llo_original>
// kernel: tpu_custom_call.1
$region0: #{tpu_custom_call.1}
  #allocation0 [shape = 'u32[]', space=smem, size = 0x4, offset = 0x4, fixed_abs, tag = 'smem constant byte address 0x4 - core index']
  #allocation1 [shape = 'u32[144,128]{1,0:T(1,128)}', space=vmem, size = 0x12000, scoped, tag = 'internal scratch']
  %s0 = inlined_call_operand.vmem [shape: f32[2,256,16], index: 0, kind: input, shape index: {}]
  %s1 = inlined_call_operand.vmem [shape: f32[2,256,16], index: 1, kind: input, shape index: {}]
  %s2 = inlined_call_operand.vmem [shape: f32[2,256,16], index: 2, kind: input, shape index: {}]
  %s3 = inlined_call_operand.vmem [shape: f32[3,16,16], index: 3, kind: input, shape index: {}]
  %s4 = inlined_call_operand.vmem [shape: f32[3,16,16], index: 4, kind: input, shape index: {}]
  %s5 = inlined_call_operand.vmem [shape: f32[3,16], index: 5, kind: input, shape index: {}]
  %s6 = inlined_call_operand.vmem [shape: f32[2,256,16], index: 6, kind: output, shape index: {}]
  %s7 = sld [smem:[#allocation0]]
  $region57: #{tpu_custom_call.1} parent=0
    _
  %s9 = ssub.s32 1, %s7
  %s10 = scalar_select 0, %s9, %s7
  loop: start=0, step=1, limit=6
  $region2: #{tpu_custom_call.1} parent=0 // loop_pre_header
    _
  $region3: #{tpu_custom_call.1} parent=0 // loop_header
    %s12 = sphi 0, %s16
    %p13 = scmp.ge.s32.totalorder %s12, 6
    %s19 = sphi 0, %s31
    %s20 = sphi 0, %s27
    %s21 = sphi 0, %s19
    %s22 = sphi 0, %s20
    %s23 = sphi 0, %s21
    %s24 = sphi 0, %s22
    %s36 = sphi 0, %s38
    %s39 = sphi 0, %s36
    %s40 = sphi 0, %s39
    %s56 = sphi 0, %s40
    %s72 = sphi 0, %s74
    %s75 = sphi 0, %s72
    %s76 = sphi 0, %s75
    %s92 = sphi 0, %s76
    %s108 = sphi 0, %s110
    %s111 = sphi 0, %s108
    %s112 = sphi 0, %s111
    %s128 = sphi 0, %s112
    %s132 = sphi 0, %s132
    %s134 = sphi 0, %s132
    %s135 = sphi 0, %s134
    %s149 = sphi 0, %s135
    %s153 = sphi 0, %s153
    %s155 = sphi 0, %s153
    %s156 = sphi 0, %s155
    %s170 = sphi 0, %s156
    %s174 = sphi 0, %s174
    %s176 = sphi 0, %s174
    %s177 = sphi 0, %s176
    %s191 = sphi 0, %s177
    %s199 = sphi 0, %s201
    %s202 = sphi 0, %s199
    %s203 = sphi 0, %s202
    %s219 = sphi 0, %s203
  $region4: #{tpu_custom_call.1} parent=0 // loop_header_branch
    %15 = sbr.rel (%p13) target = $region8
  $region5: #{tpu_custom_call.1} parent=0 // loop_body
    %s17 = ssub.s32 %s12, 1
    %s18 = ssub.s32 %s12, 2
    %s25 = sadd.s32 1, %s20
    %p26 = scmp.ge.s32.totalorder %s25, 2
    %s27 = scalar_select %p26, 0, %s25
    %s28 = sadd.s32 1, %s19
    %s29 = scalar_select %p26, %s28, %s19
    %p30 = scmp.ge.s32.totalorder %s29, 2
    %s31 = scalar_select %p30, 0, %s29
    %s32 = ssub.s32 %s19, %s31
    %s33 = ssub.s32 %s20, %s27
    %s34 = sor.u32 %s32, %s33
    %p35 = scmp.eq.s32.totalorder %s34, 0
    %s37 = sadd.s32 %s36, 1
    %s38 = scalar_select %p35, %s36, %s37
    %p41 = pneg %p35
    %p42 = scmp.eq.s32.totalorder %s12, 3
    %p43 = por %p41, %p42
    %p44 = scmp.ne.s32.totalorder %s36, %s39
    %p45 = scmp.eq.s32.totalorder %s12, 0
    %p46 = por %p44, %p45
    %p47 = scmp.ne.s32.totalorder %s36, %s39
    %p48 = scmp.eq.s32.totalorder %s17, 3
    %p49 = por %p47, %p48
    %p50 = scmp.ne.s32.totalorder %s39, %s40
    %p51 = scmp.eq.s32.totalorder %s17, 0
    %p52 = por %p50, %p51
    %p53 = scmp.ne.s32.totalorder %s39, %s40
    %p54 = scmp.eq.s32.totalorder %s18, 3
    %p55 = por %p53, %p54
    %p57 = scmp.ne.s32.totalorder %s40, %s56
    %p58 = scmp.eq.s32.totalorder %s18, 0
    %p59 = por %p57, %p58
    %s60 = smul.u32 %s20, 16
    %s61 = ssub.s32 %s60, 1
    %p62 = scmp.gt.s32.totalorder %s61, 0
    %s63 = scalar_select %p62, %s61, 0
    %s64 = smul.u32 %s27, 16
    %s65 = ssub.s32 %s64, 1
    %p66 = scmp.gt.s32.totalorder %s65, 0
    %s67 = scalar_select %p66, %s65, 0
    %s68 = ssub.s32 %s19, %s31
    %s69 = ssub.s32 %s63, %s67
    %s70 = sor.u32 %s68, %s69
    %p71 = scmp.eq.s32.totalorder %s70, 0
    %s73 = sadd.s32 %s72, 1
    %s74 = scalar_select %p71, %s72, %s73
    %p77 = pneg %p71
    %p78 = scmp.eq.s32.totalorder %s12, 3
    %p79 = por %p77, %p78
    %p80 = scmp.ne.s32.totalorder %s72, %s75
    %p81 = scmp.eq.s32.totalorder %s12, 0
    %p82 = por %p80, %p81
    %p83 = scmp.ne.s32.totalorder %s72, %s75
    %p84 = scmp.eq.s32.totalorder %s17, 3
    %p85 = por %p83, %p84
    %p86 = scmp.ne.s32.totalorder %s75, %s76
    %p87 = scmp.eq.s32.totalorder %s17, 0
    %p88 = por %p86, %p87
    %p89 = scmp.ne.s32.totalorder %s75, %s76
    %p90 = scmp.eq.s32.totalorder %s18, 3
    %p91 = por %p89, %p90
    %p93 = scmp.ne.s32.totalorder %s76, %s92
    %p94 = scmp.eq.s32.totalorder %s18, 0
    %p95 = por %p93, %p94
    %s96 = sadd.s32 %s20, 1
    %s97 = smul.u32 %s96, 16
    %p98 = scmp.lt.s32.totalorder %s97, 31
    %s99 = scalar_select %p98, %s97, 31
    %s100 = sadd.s32 %s27, 1
    %s101 = smul.u32 %s100, 16
    %p102 = scmp.lt.s32.totalorder %s101, 31
    %s103 = scalar_select %p102, %s101, 31
    %s104 = ssub.s32 %s19, %s31
    %s105 = ssub.s32 %s99, %s103
    %s106 = sor.u32 %s104, %s105
    %p107 = scmp.eq.s32.totalorder %s106, 0
    %s109 = sadd.s32 %s108, 1
    %s110 = scalar_select %p107, %s108, %s109
    %p113 = pneg %p107
    %p114 = scmp.eq.s32.totalorder %s12, 3
    %p115 = por %p113, %p114
    %p116 = scmp.ne.s32.totalorder %s108, %s111
    %p117 = scmp.eq.s32.totalorder %s12, 0
    %p118 = por %p116, %p117
    %p119 = scmp.ne.s32.totalorder %s108, %s111
    %p120 = scmp.eq.s32.totalorder %s17, 3
    %p121 = por %p119, %p120
    %p122 = scmp.ne.s32.totalorder %s111, %s112
    %p123 = scmp.eq.s32.totalorder %s17, 0
    %p124 = por %p122, %p123
    %p125 = scmp.ne.s32.totalorder %s111, %s112
    %p126 = scmp.eq.s32.totalorder %s18, 3
    %p127 = por %p125, %p126
    %p129 = scmp.ne.s32.totalorder %s112, %s128
    %p130 = scmp.eq.s32.totalorder %s18, 0
    %p131 = por %p129, %p130
    %s133 = sadd.s32 %s132, 1
    %p136 = scmp.eq.s32.totalorder %s12, 3
    %p137 = scmp.ne.s32.totalorder %s132, %s134
    %p138 = scmp.eq.s32.totalorder %s12, 0
    %p139 = por %p137, %p138
    %p140 = scmp.ne.s32.totalorder %s132, %s134
    %p141 = scmp.eq.s32.totalorder %s17, 3
    %p142 = por %p140, %p141
    %p143 = scmp.ne.s32.totalorder %s134, %s135
    %p144 = scmp.eq.s32.totalorder %s17, 0
    %p145 = por %p143, %p144
    %p146 = scmp.ne.s32.totalorder %s134, %s135
    %p147 = scmp.eq.s32.totalorder %s18, 3
    %p148 = por %p146, %p147
    %p150 = scmp.ne.s32.totalorder %s135, %s149
    %p151 = scmp.eq.s32.totalorder %s18, 0
    %p152 = por %p150, %p151
    %s154 = sadd.s32 %s153, 1
    %p157 = scmp.eq.s32.totalorder %s12, 3
    %p158 = scmp.ne.s32.totalorder %s153, %s155
    %p159 = scmp.eq.s32.totalorder %s12, 0
    %p160 = por %p158, %p159
    %p161 = scmp.ne.s32.totalorder %s153, %s155
    %p162 = scmp.eq.s32.totalorder %s17, 3
    %p163 = por %p161, %p162
    %p164 = scmp.ne.s32.totalorder %s155, %s156
    %p165 = scmp.eq.s32.totalorder %s17, 0
    %p166 = por %p164, %p165
    %p167 = scmp.ne.s32.totalorder %s155, %s156
    %p168 = scmp.eq.s32.totalorder %s18, 3
    %p169 = por %p167, %p168
    %p171 = scmp.ne.s32.totalorder %s156, %s170
    %p172 = scmp.eq.s32.totalorder %s18, 0
    %p173 = por %p171, %p172
    %s175 = sadd.s32 %s174, 1
    %p178 = scmp.eq.s32.totalorder %s12, 3
    %p179 = scmp.ne.s32.totalorder %s174, %s176
    %p180 = scmp.eq.s32.totalorder %s12, 0
    %p181 = por %p179, %p180
    %p182 = scmp.ne.s32.totalorder %s174, %s176
    %p183 = scmp.eq.s32.totalorder %s17, 3
    %p184 = por %p182, %p183
    %p185 = scmp.ne.s32.totalorder %s176, %s177
    %p186 = scmp.eq.s32.totalorder %s17, 0
    %p187 = por %p185, %p186
    %p188 = scmp.ne.s32.totalorder %s176, %s177
    %p189 = scmp.eq.s32.totalorder %s18, 3
    %p190 = por %p188, %p189
    %p192 = scmp.ne.s32.totalorder %s177, %s191
    %p193 = scmp.eq.s32.totalorder %s18, 0
    %p194 = por %p192, %p193
    %s195 = ssub.s32 %s19, %s31
    %s196 = ssub.s32 %s20, %s27
    %s197 = sor.u32 %s195, %s196
    %p198 = scmp.eq.s32.totalorder %s197, 0
    %s200 = sadd.s32 %s199, 1
    %s201 = scalar_select %p198, %s199, %s200
    %p204 = pneg %p198
    %p205 = scmp.eq.s32.totalorder %s12, 3
    %p206 = por %p204, %p205
    %p207 = scmp.ne.s32.totalorder %s199, %s202
    %p208 = scmp.eq.s32.totalorder %s12, 0
    %p209 = por %p207, %p208
    %p210 = scmp.ne.s32.totalorder %s199, %s202
    %p211 = scmp.eq.s32.totalorder %s17, 3
    %p212 = por %p210, %p211
    %p213 = scmp.ne.s32.totalorder %s202, %s203
    %p214 = scmp.eq.s32.totalorder %s17, 0
    %p215 = por %p213, %p214
    %p216 = scmp.ne.s32.totalorder %s202, %s203
    %p217 = scmp.eq.s32.totalorder %s18, 3
    %p218 = por %p216, %p217
    %p220 = scmp.ne.s32.totalorder %s203, %s219
    %p221 = scmp.eq.s32.totalorder %s18, 0
    %p222 = por %p220, %p221
    %p223 = scmp.le.s32.totalorder 1, %s12
    %p224 = scmp.lt.s32.totalorder %s12, 5
    %p225 = pnand %p223, %p224
    %p226 = pneg %p225
    // Predicated region
    $region9: #{tpu_custom_call.1} parent=5 // pred_check
      _
    $region10: #{tpu_custom_call.1} parent=5 // pred_check_branch
      %228 = sbr.rel (%p225) target = $region12
    $region11: #{tpu_custom_call.1} parent=5 // pred_region
      %s229 = ssub.s32 %s12, 1
      // Predicated region
      $region13: #{tpu_custom_call.1} parent=11 // pred_check
        %p230 = pneg %p145
      $region14: #{tpu_custom_call.1} parent=11 // pred_check_branch
        %232 = sbr.rel (%p230) target = $region16
      $region15: #{tpu_custom_call.1} parent=11 // pred_region
        _
      $region16: #{tpu_custom_call.1} parent=11 // pred_fallthru
        _
      // Predicated region
      $region17: #{tpu_custom_call.1} parent=11 // pred_check
        %p233 = pneg %p166
      $region18: #{tpu_custom_call.1} parent=11 // pred_check_branch
        %235 = sbr.rel (%p233) target = $region20
      $region19: #{tpu_custom_call.1} parent=11 // pred_region
        _
      $region20: #{tpu_custom_call.1} parent=11 // pred_fallthru
        _
      // Predicated region
      $region21: #{tpu_custom_call.1} parent=11 // pred_check
        %p236 = pneg %p187
      $region22: #{tpu_custom_call.1} parent=11 // pred_check_branch
        %238 = sbr.rel (%p236) target = $region24
      $region23: #{tpu_custom_call.1} parent=11 // pred_region
        _
      $region24: #{tpu_custom_call.1} parent=11 // pred_fallthru
        _
    $region12: #{tpu_custom_call.1} parent=5 // pred_fallthru
      _
    %p239 = scmp.lt.s32.totalorder %s12, 4
    // Predicated region
    $region25: #{tpu_custom_call.1} parent=5 // pred_check
      %p240 = pneg %p239
    $region26: #{tpu_custom_call.1} parent=5 // pred_check_branch
      %242 = sbr.rel (%p240) target = $region28
    $region27: #{tpu_custom_call.1} parent=5 // pred_region
      // Predicated region
      $region29: #{tpu_custom_call.1} parent=27 // pred_check
        %p243 = pneg %p46
      $region30: #{tpu_custom_call.1} parent=27 // pred_check_branch
        %245 = sbr.rel (%p243) target = $region32
      $region31: #{tpu_custom_call.1} parent=27 // pred_region
        %s246 = smul.u32 16, %s20
        %p247 = scmp.lt.s32.totalorder %s19, 1
        %s248 = scalar_select %p247, %s19, 1
        %p249 = scmp.lt.s32.totalorder %s246, 31
        %s250 = scalar_select %p249, %s246, 31
        %s251 = smul.addr %s248, 32
        %s252 = sadd.s32 %s250, %s251
        %s253 = smul.addr %s252, 8
        %s254 = scalar_lea.vmem %s0, %s253
        %s255 = smul.u32 16, %s20
      $region32: #{tpu_custom_call.1} parent=27 // pred_fallthru
        _
      // Predicated region
      $region33: #{tpu_custom_call.1} parent=27 // pred_check
        %p256 = pneg %p82
      $region34: #{tpu_custom_call.1} parent=27 // pred_check_branch
        %258 = sbr.rel (%p256) target = $region36
      $region35: #{tpu_custom_call.1} parent=27 // pred_region
        %s259 = smul.u32 %s20, 16
        %s260 = ssub.s32 %s259, 1
        %p261 = scmp.gt.s32.totalorder %s260, 0
        %s262 = scalar_select %p261, %s260, 0
        %p263 = scmp.lt.s32.totalorder %s19, 1
        %s264 = scalar_select %p263, %s19, 1
        %p265 = scmp.lt.s32.totalorder %s262, 31
        %s266 = scalar_select %p265, %s262, 31
        %s267 = smul.addr %s264, 32
        %s268 = sadd.s32 %s266, %s267
        %s269 = smul.addr %s268, 8
        %s270 = scalar_lea.vmem %s1, %s269
        %s271 = smul.u32 %s20, 16
        %s272 = ssub.s32 %s271, 1
        %p273 = scmp.gt.s32.totalorder %s272, 0
        %s274 = scalar_select %p273, %s272, 0
      $region36: #{tpu_custom_call.1} parent=27 // pred_fallthru
        _
      // Predicated region
      $region37: #{tpu_custom_call.1} parent=27 // pred_check
        %p275 = pneg %p118
      $region38: #{tpu_custom_call.1} parent=27 // pred_check_branch
        %277 = sbr.rel (%p275) target = $region40
      $region39: #{tpu_custom_call.1} parent=27 // pred_region
        %s278 = sadd.s32 %s20, 1
        %s279 = smul.u32 %s278, 16
        %p280 = scmp.lt.s32.totalorder %s279, 31
        %s281 = scalar_select %p280, %s279, 31
        %p282 = scmp.lt.s32.totalorder %s19, 1
        %s283 = scalar_select %p282, %s19, 1
        %p284 = scmp.lt.s32.totalorder %s281, 31
        %s285 = scalar_select %p284, %s281, 31
        %s286 = smul.addr %s283, 32
        %s287 = sadd.s32 %s285, %s286
        %s288 = smul.addr %s287, 8
        %s289 = scalar_lea.vmem %s2, %s288
        %s290 = sadd.s32 %s20, 1
        %s291 = smul.u32 %s290, 16
        %p292 = scmp.lt.s32.totalorder %s291, 31
        %s293 = scalar_select %p292, %s291, 31
      $region40: #{tpu_custom_call.1} parent=27 // pred_fallthru
        _
    $region28: #{tpu_custom_call.1} parent=5 // pred_fallthru
      _
    %p294 = scmp.le.s32.totalorder 1, %s12
    %p295 = scmp.lt.s32.totalorder %s12, 5
    %p296 = pnand %p294, %p295
    %p297 = pneg %p296
    // Predicated region
    $region41: #{tpu_custom_call.1} parent=5 // pred_check
      _
    $region42: #{tpu_custom_call.1} parent=5 // pred_check_branch
      %299 = sbr.rel (%p296) target = $region44
    $region43: #{tpu_custom_call.1} parent=5 // pred_region
      %s300 = ssub.s32 %s12, 1
      %s301 = smul.u32 16, %s22
      %p302 = scmp.lt.s32.totalorder %s21, 1
      %s303 = scalar_select %p302, %s21, 1
      %p304 = scmp.lt.s32.totalorder %s301, 31
      %s305 = scalar_select %p304, %s301, 31
      %s306 = smul.addr %s303, 32
      %s307 = sadd.s32 %s305, %s306
      %s308 = smul.addr %s307, 8
      %s309 = scalar_lea.vmem %s0, %s308
      %p310 = pneg %p52
      %p311 = pneg %p49
      %s312 = smul.u32 %s22, 16
      %s313 = ssub.s32 %s312, 1
      %p314 = scmp.gt.s32.totalorder %s313, 0
      %s315 = scalar_select %p314, %s313, 0
      %p316 = scmp.lt.s32.totalorder %s21, 1
      %s317 = scalar_select %p316, %s21, 1
      %p318 = scmp.lt.s32.totalorder %s315, 31
      %s319 = scalar_select %p318, %s315, 31
      %s320 = smul.addr %s317, 32
      %s321 = sadd.s32 %s319, %s320
      %s322 = smul.addr %s321, 8
      %s323 = scalar_lea.vmem %s1, %s322
      %p324 = pneg %p88
      %p325 = pneg %p85
      %s326 = sadd.s32 %s22, 1
      %s327 = smul.u32 %s326, 16
      %p328 = scmp.lt.s32.totalorder %s327, 31
      %s329 = scalar_select %p328, %s327, 31
      %p330 = scmp.lt.s32.totalorder %s21, 1
      %s331 = scalar_select %p330, %s21, 1
      %p332 = scmp.lt.s32.totalorder %s329, 31
      %s333 = scalar_select %p332, %s329, 31
      %s334 = smul.addr %s331, 32
      %s335 = sadd.s32 %s333, %s334
      %s336 = smul.addr %s335, 8
      %s337 = scalar_lea.vmem %s2, %s336
      %p338 = pneg %p124
      %p339 = pneg %p121
      %p340 = pneg %p145
      %p341 = pneg %p142
      %p342 = pneg %p166
      %p343 = pneg %p163
      %p344 = pneg %p187
      %p345 = pneg %p184
      %p346 = pneg %p215
      %p347 = pneg %p212
      %s348 = smul.u32 16, %s22
      %p349 = scmp.lt.s32.totalorder %s21, 1
      %s350 = scalar_select %p349, %s21, 1
      %p351 = scmp.lt.s32.totalorder %s348, 31
      %s352 = scalar_select %p351, %s348, 31
      %s353 = smul.addr %s350, 32
      %s354 = sadd.s32 %s352, %s353
      %s355 = smul.addr %s354, 8
      %s356 = scalar_lea.vmem %s6, %s355
      %s357 = smul.u32 16, %s22
      %p358 = scmp.lt.s32.totalorder %s21, 1
      %s359 = scalar_select %p358, %s21, 1
      %p360 = scmp.lt.s32.totalorder %s357, 31
      %s361 = scalar_select %p360, %s357, 31
      %s362 = smul.addr %s359, 32
      %s363 = sadd.s32 %s361, %s362
      %s364 = smul.addr %s363, 8
      %s365 = scalar_lea.vmem %s0, %s364
      %s366 = smul.u32 16, %s22
      %s367 = smul.u32 %s22, 16
      %s368 = ssub.s32 %s367, 1
      %p369 = scmp.gt.s32.totalorder %s368, 0
      %s370 = scalar_select %p369, %s368, 0
      %p371 = scmp.lt.s32.totalorder %s21, 1
      %s372 = scalar_select %p371, %s21, 1
      %p373 = scmp.lt.s32.totalorder %s370, 31
      %s374 = scalar_select %p373, %s370, 31
      %s375 = smul.addr %s372, 32
      %s376 = sadd.s32 %s374, %s375
      %s377 = smul.addr %s376, 8
      %s378 = scalar_lea.vmem %s1, %s377
      %s379 = smul.u32 %s22, 16
      %s380 = ssub.s32 %s379, 1
      %p381 = scmp.gt.s32.totalorder %s380, 0
      %s382 = scalar_select %p381, %s380, 0
      %s383 = sadd.s32 %s22, 1
      %s384 = smul.u32 %s383, 16
      %p385 = scmp.lt.s32.totalorder %s384, 31
      %s386 = scalar_select %p385, %s384, 31
      %p387 = scmp.lt.s32.totalorder %s21, 1
      %s388 = scalar_select %p387, %s21, 1
      %p389 = scmp.lt.s32.totalorder %s386, 31
      %s390 = scalar_select %p389, %s386, 31
      %s391 = smul.addr %s388, 32
      %s392 = sadd.s32 %s390, %s391
      %s393 = smul.addr %s392, 8
      %s394 = scalar_lea.vmem %s2, %s393
      %s395 = sadd.s32 %s22, 1
      %s396 = smul.u32 %s395, 16
      %p397 = scmp.lt.s32.totalorder %s396, 31
      %s398 = scalar_select %p397, %s396, 31
      %s399 = smul.u32 16, %s22
      %p400 = scmp.lt.s32.totalorder %s21, 1
      %s401 = scalar_select %p400, %s21, 1
      %p402 = scmp.lt.s32.totalorder %s399, 31
      %s403 = scalar_select %p402, %s399, 31
      %s404 = smul.addr %s401, 32
      %s405 = sadd.s32 %s403, %s404
      %s406 = smul.addr %s405, 8
      %s407 = scalar_lea.vmem %s6, %s406
      %s408 = smul.u32 16, %s22
      %s409 = smul.u32 %s22, 128
      %v410 = vld [vmem:[%s365] sm:$0xff]
      %v411 = vld [vmem:[%s365 + $0x8] sm:$0xff]
      %v412 = vld [vmem:[%s365 + $0x10] sm:$0xff]
      %v413 = vld [vmem:[%s365 + $0x18] sm:$0xff]
      %v414 = vld [vmem:[%s365 + $0x20] sm:$0xff]
      %v415 = vld [vmem:[%s365 + $0x28] sm:$0xff]
      %v416 = vld [vmem:[%s365 + $0x30] sm:$0xff]
      %v417 = vld [vmem:[%s365 + $0x38] sm:$0xff]
      %v418 = vld [vmem:[%s365 + $0x40] sm:$0xff]
      %v419 = vld [vmem:[%s365 + $0x48] sm:$0xff]
      %v420 = vld [vmem:[%s365 + $0x50] sm:$0xff]
      %v421 = vld [vmem:[%s365 + $0x58] sm:$0xff]
      %v422 = vld [vmem:[%s365 + $0x60] sm:$0xff]
      %v423 = vld [vmem:[%s365 + $0x68] sm:$0xff]
      %v424 = vld [vmem:[%s365 + $0x70] sm:$0xff]
      %v425 = vld [vmem:[%s365 + $0x78] sm:$0xff]
      %v426 = vld [vmem:[%s5] sm:$0x7]
      %v427 = vld [vmem:[%s378 + $0x6] sm:$0x3]
      %v428 = vld [vmem:[%s394] sm:$0x3]
      %s429 = ssub.s32 %s409, 2
      %v430 = vlaneseq
      %v431 = vshrl.u32 %v430, 7
      %v432 = vstv %s429
      %v433 = vadd.s32 %v432, %v431
      %s434 = sadd.s32 %s409, 128
      %v435 = vstv %s434
      %v436 = vadd.s32 %v435, %v431
      %vm437 = vcmp.ge.s32.totalorder %v433, 0
      %v438 = vsel %vm437, 1, 0
      %vm439 = vcmp.eq.s32.totalorder %v438, 1
      %v440 = vsel %vm439, %v427, 0.0
      %vm441 = vcmp.lt.s32.totalorder %v436, 256
      %v442 = vsel %vm441, 1, 0
      %vm443 = vcmp.eq.s32.totalorder %v442, 1
      %v444 = vsel %vm443, %v428, 0.0
      %vm461 = vcmask 1041408
      %v462 = vrot.slane %v410, 6
      %v463 = vrot.slane %v411, 6
      %v464 = vsel %vm461, %v462, %v463
      %v465 = vrot.slane %v412, 6
      %v466 = vsel %vm461, %v463, %v465
      %v467 = vrot.slane %v413, 6
      %v468 = vsel %vm461, %v465, %v467
      %v469 = vrot.slane %v414, 6
      %v470 = vsel %vm461, %v467, %v469
      %v471 = vrot.slane %v415, 6
      %v472 = vsel %vm461, %v469, %v471
      %v473 = vrot.slane %v416, 6
      %v474 = vsel %vm461, %v471, %v473
      %v475 = vrot.slane %v417, 6
      %v476 = vsel %vm461, %v473, %v475
      %v477 = vrot.slane %v418, 6
      %v478 = vsel %vm461, %v475, %v477
      %v479 = vrot.slane %v419, 6
      %v480 = vsel %vm461, %v477, %v479
      %v481 = vrot.slane %v420, 6
      %v482 = vsel %vm461, %v479, %v481
      %v483 = vrot.slane %v421, 6
      %v484 = vsel %vm461, %v481, %v483
      %v485 = vrot.slane %v422, 6
      %v486 = vsel %vm461, %v483, %v485
      %v487 = vrot.slane %v423, 6
      %v488 = vsel %vm461, %v485, %v487
      %v489 = vrot.slane %v424, 6
      %v490 = vsel %vm461, %v487, %v489
      %v491 = vrot.slane %v425, 6
      %v492 = vsel %vm461, %v489, %v491
      %v496 = vrot.slane %v444, 6
      %v498 = vsel %vm461, %v440, %v462
      %v499 = vsel %vm461, %v491, %v496
      %v500 = vld [vmem:[%s3] sm:$0xff]
      %v501 = vld [vmem:[%s3 + $0x8] sm:$0xff]
      %s502 = scalar_lea.vmem %s3, 16
      %v503 = vld [vmem:[%s502] sm:$0xff]
      %v504 = vld [vmem:[%s502 + $0x8] sm:$0xff]
      %vm507 = vcmask 1046528
      %v508 = vrot.slane %v498, 1
      %v509 = vrot.slane %v464, 1
      %v510 = vsel %vm507, %v508, %v509
      %v511 = vrot.slane %v466, 1
      %v512 = vsel %vm507, %v509, %v511
      %v513 = vrot.slane %v468, 1
      %v514 = vsel %vm507, %v511, %v513
      %v515 = vrot.slane %v470, 1
      %v516 = vsel %vm507, %v513, %v515
      %v517 = vrot.slane %v472, 1
      %v518 = vsel %vm507, %v515, %v517
      %v519 = vrot.slane %v474, 1
      %v520 = vsel %vm507, %v517, %v519
      %v521 = vrot.slane %v476, 1
      %v522 = vsel %vm507, %v519, %v521
      %v523 = vrot.slane %v478, 1
      %v524 = vsel %vm507, %v521, %v523
      %v525 = vrot.slane %v480, 1
      %v526 = vsel %vm507, %v523, %v525
      %v527 = vrot.slane %v482, 1
      %v528 = vsel %vm507, %v525, %v527
      %v529 = vrot.slane %v484, 1
      %v530 = vsel %vm507, %v527, %v529
      %v531 = vrot.slane %v486, 1
      %v532 = vsel %vm507, %v529, %v531
      %v533 = vrot.slane %v488, 1
      %v534 = vsel %vm507, %v531, %v533
      %v535 = vrot.slane %v490, 1
      %v536 = vsel %vm507, %v533, %v535
      %v537 = vrot.slane %v492, 1
      %v538 = vsel %vm507, %v535, %v537
      %v539 = vrot.slane %v499, 1
      %v540 = vsel %vm507, %v537, %v539
      %vm541 = vcmask 130048
      %v542 = vsel %vm541, %v510, 0
      %v544 = vsel %vm541, %v512, 0
      %v546 = vsel %vm541, %v514, 0
      %v548 = vsel %vm541, %v516, 0
      %v550 = vsel %vm541, %v518, 0
      %v552 = vsel %vm541, %v520, 0
      %v554 = vsel %vm541, %v522, 0
      %v556 = vsel %vm541, %v524, 0
      %v558 = vsel %vm541, %v526, 0
      %v560 = vsel %vm541, %v528, 0
      %v562 = vsel %vm541, %v530, 0
      %v564 = vsel %vm541, %v532, 0
      %v566 = vsel %vm541, %v534, 0
      %v568 = vsel %vm541, %v536, 0
      %v570 = vsel %vm541, %v538, 0
      %v572 = vsel %vm541, %v540, 0
      %v574 = vsel %vm541, %v539, 0
      %576 = vmatprep.subr.mxu0 0.0
      %577 = vmatpush1.msra.mxu0 0.0
      %578 = vmatprep.subr.mxu0 0.0
      %579 = vmatpush1.msra.mxu0 0.0
      %580 = vmatprep.subr.mxu0 0.0
      %581 = vmatpush1.msra.mxu0 0.0
      %582 = vmatprep.subr.mxu0 0.0
      %583 = vmatpush1.msra.mxu0 0.0
      %584 = vmatprep.subr.mxu0 0.0
      %585 = vmatpush1.msra.mxu0 0.0
      %586 = vmatprep.subr.mxu0 0.0
      %587 = vmatpush1.msra.mxu0 0.0
      %588 = vmatprep.subr.mxu0 0.0
      %589 = vmatpush1.msra.mxu0 0.0
      %590 = vmatprep.subr.mxu0 0.0
      %591 = vmatpush1.msra.mxu0 0.0
      %592 = vmatprep.subr.mxu0 0.0
      %593 = vmatpush1.msra.mxu0 0.0
      %594 = vmatprep.subr.mxu0 0.0
      %595 = vmatpush1.msra.mxu0 0.0
      %596 = vmatprep.subr.mxu0 0.0
      %597 = vmatpush1.msra.mxu0 0.0
      %598 = vmatprep.subr.mxu0 0.0
      %599 = vmatpush1.msra.mxu0 0.0
      %600 = vmatprep.subr.mxu0 0.0
      %601 = vmatpush1.msra.mxu0 0.0
      %602 = vmatprep.subr.mxu0 0.0
      %603 = vmatpush1.msra.mxu0 0.0
      %604 = vmatprep.subr.mxu0 0.0
      %605 = vmatpush1.msra.mxu0 %v504
      %606 = vmatprep.subr.mxu0 0.0
      %607 = vmatpush1.msra.mxu0 %v503
      %608 = vmatprep.subr.mxu0 0.0
      %609 = vmatpush2.msra.mxu0 0.0
      %610 = vmatprep.subr.mxu0 0.0
      %611 = vmatpush2.msra.mxu0 0.0
      %612 = vmatprep.subr.mxu0 0.0
      %613 = vmatpush2.msra.mxu0 0.0
      %614 = vmatprep.subr.mxu0 0.0
      %615 = vmatpush2.msra.mxu0 0.0
      %616 = vmatprep.subr.mxu0 0.0
      %617 = vmatpush2.msra.mxu0 0.0
      %618 = vmatprep.subr.mxu0 0.0
      %619 = vmatpush2.msra.mxu0 0.0
      %620 = vmatprep.subr.mxu0 0.0
      %621 = vmatpush2.msra.mxu0 0.0
      %622 = vmatprep.subr.mxu0 0.0
      %623 = vmatpush2.msra.mxu0 0.0
      %624 = vmatprep.subr.mxu0 0.0
      %625 = vmatpush2.msra.mxu0 0.0
      %626 = vmatprep.subr.mxu0 0.0
      %627 = vmatpush2.msra.mxu0 0.0
      %628 = vmatprep.subr.mxu0 0.0
      %629 = vmatpush2.msra.mxu0 0.0
      %630 = vmatprep.subr.mxu0 0.0
      %631 = vmatpush2.msra.mxu0 0.0
      %632 = vmatprep.subr.mxu0 0.0
      %633 = vmatpush2.msra.mxu0 0.0
      %634 = vmatprep.subr.mxu0 0.0
      %635 = vmatpush2.msra.mxu0 0.0
      %636 = vmatprep.subr.mxu0 0.0
      %637 = vmatpush2.msra.mxu0 0.0
      %638 = vmatprep.subr.mxu0 0.0
      %639 = vmatpush2.msra.mxu0 0.0
      %640 = vmatprep.mubr.f32.mxu0 0.0
      %641 = vmatmul.mubr.f32.gmra.mxu0 %v542
      %v642 = vpop.f32.mrf.mxu0
      %v643 = vadd.f32 0.0, %v642
      %v644 = vpop.f32.mrf.mxu0
      %645 = vmatprep.mubr.f32.mxu0 0.0
      %646 = vmatmul.mubr.f32.gmra.mxu0 %v544
      %v647 = vpop.f32.mrf.mxu0
      %v648 = vadd.f32 0.0, %v647
      %v649 = vpop.f32.mrf.mxu0
      %650 = vmatprep.mubr.f32.mxu0 0.0
      %651 = vmatmul.mubr.f32.gmra.mxu0 %v546
      %v652 = vpop.f32.mrf.mxu0
      %v653 = vadd.f32 0.0, %v652
      %v654 = vpop.f32.mrf.mxu0
      %655 = vmatprep.mubr.f32.mxu0 0.0
      %656 = vmatmul.mubr.f32.gmra.mxu0 %v548
      %v657 = vpop.f32.mrf.mxu0
      %v658 = vadd.f32 0.0, %v657
      %v659 = vpop.f32.mrf.mxu0
      %660 = vmatprep.mubr.f32.mxu0 0.0
      %661 = vmatmul.mubr.f32.gmra.mxu0 %v550
      %v662 = vpop.f32.mrf.mxu0
      %v663 = vadd.f32 0.0, %v662
      %v664 = vpop.f32.mrf.mxu0
      %665 = vmatprep.mubr.f32.mxu0 0.0
      %666 = vmatmul.mubr.f32.gmra.mxu0 %v552
      %v667 = vpop.f32.mrf.mxu0
      %v668 = vadd.f32 0.0, %v667
      %v669 = vpop.f32.mrf.mxu0
      %670 = vmatprep.mubr.f32.mxu0 0.0
      %671 = vmatmul.mubr.f32.gmra.mxu0 %v554
      %v672 = vpop.f32.mrf.mxu0
      %v673 = vadd.f32 0.0, %v672
      %v674 = vpop.f32.mrf.mxu0
      %675 = vmatprep.mubr.f32.mxu0 0.0
      %676 = vmatmul.mubr.f32.gmra.mxu0 %v556
      %v677 = vpop.f32.mrf.mxu0
      %v678 = vadd.f32 0.0, %v677
      %v679 = vpop.f32.mrf.mxu0
      %680 = vmatprep.mubr.f32.mxu0 0.0
      %681 = vmatmul.mubr.f32.gmra.mxu0 %v558
      %v682 = vpop.f32.mrf.mxu0
      %v683 = vadd.f32 0.0, %v682
      %v684 = vpop.f32.mrf.mxu0
      %685 = vmatprep.mubr.f32.mxu0 0.0
      %686 = vmatmul.mubr.f32.gmra.mxu0 %v560
      %v687 = vpop.f32.mrf.mxu0
      %v688 = vadd.f32 0.0, %v687
      %v689 = vpop.f32.mrf.mxu0
      %690 = vmatprep.mubr.f32.mxu0 0.0
      %691 = vmatmul.mubr.f32.gmra.mxu0 %v562
      %v692 = vpop.f32.mrf.mxu0
      %v693 = vadd.f32 0.0, %v692
      %v694 = vpop.f32.mrf.mxu0
      %695 = vmatprep.mubr.f32.mxu0 0.0
      %696 = vmatmul.mubr.f32.gmra.mxu0 %v564
      %v697 = vpop.f32.mrf.mxu0
      %v698 = vadd.f32 0.0, %v697
      %v699 = vpop.f32.mrf.mxu0
      %700 = vmatprep.mubr.f32.mxu0 0.0
      %701 = vmatmul.mubr.f32.gmra.mxu0 %v566
      %v702 = vpop.f32.mrf.mxu0
      %v703 = vadd.f32 0.0, %v702
      %v704 = vpop.f32.mrf.mxu0
      %705 = vmatprep.mubr.f32.mxu0 0.0
      %706 = vmatmul.mubr.f32.gmra.mxu0 %v568
      %v707 = vpop.f32.mrf.mxu0
      %v708 = vadd.f32 0.0, %v707
      %v709 = vpop.f32.mrf.mxu0
      %710 = vmatprep.mubr.f32.mxu0 0.0
      %711 = vmatmul.mubr.f32.gmra.mxu0 %v570
      %v712 = vpop.f32.mrf.mxu0
      %v713 = vadd.f32 0.0, %v712
      %v714 = vpop.f32.mrf.mxu0
      %715 = vmatprep.mubr.f32.mxu0 0.0
      %716 = vmatmul.mubr.f32.gmra.mxu0 %v572
      %v717 = vpop.f32.mrf.mxu0
      %v718 = vadd.f32 0.0, %v717
      %v719 = vpop.f32.mrf.mxu0
      %720 = vmatprep.mubr.f32.mxu0 0.0
      %721 = vmatmul.mubr.f32.gmra.mxu0 %v574
      %v722 = vpop.f32.mrf.mxu0
      %v723 = vadd.f32 0.0, %v722
      %v724 = vpop.f32.mrf.mxu0
      %725 = vdwg.mxu0
      %v726 = vsel %vm541, %v498, 0
      %v728 = vsel %vm541, %v464, 0
      %v730 = vsel %vm541, %v466, 0
      %v732 = vsel %vm541, %v468, 0
      %v734 = vsel %vm541, %v470, 0
      %v736 = vsel %vm541, %v472, 0
      %v738 = vsel %vm541, %v474, 0
      %v740 = vsel %vm541, %v476, 0
      %v742 = vsel %vm541, %v478, 0
      %v744 = vsel %vm541, %v480, 0
      %v746 = vsel %vm541, %v482, 0
      %v748 = vsel %vm541, %v484, 0
      %v750 = vsel %vm541, %v486, 0
      %v752 = vsel %vm541, %v488, 0
      %v754 = vsel %vm541, %v490, 0
      %v756 = vsel %vm541, %v492, 0
      %v758 = vsel %vm541, %v499, 0
      %760 = vmatprep.subr.mxu0 0.0
      %761 = vmatpush1.msra.mxu0 0.0
      %762 = vmatprep.subr.mxu0 0.0
      %763 = vmatpush1.msra.mxu0 0.0
      %764 = vmatprep.subr.mxu0 0.0
      %765 = vmatpush1.msra.mxu0 0.0
      %766 = vmatprep.subr.mxu0 0.0
      %767 = vmatpush1.msra.mxu0 0.0
      %768 = vmatprep.subr.mxu0 0.0
      %769 = vmatpush1.msra.mxu0 0.0
      %770 = vmatprep.subr.mxu0 0.0
      %771 = vmatpush1.msra.mxu0 0.0
      %772 = vmatprep.subr.mxu0 0.0
      %773 = vmatpush1.msra.mxu0 0.0
      %774 = vmatprep.subr.mxu0 0.0
      %775 = vmatpush1.msra.mxu0 0.0
      %776 = vmatprep.subr.mxu0 0.0
      %777 = vmatpush1.msra.mxu0 0.0
      %778 = vmatprep.subr.mxu0 0.0
      %779 = vmatpush1.msra.mxu0 0.0
      %780 = vmatprep.subr.mxu0 0.0
      %781 = vmatpush1.msra.mxu0 0.0
      %782 = vmatprep.subr.mxu0 0.0
      %783 = vmatpush1.msra.mxu0 0.0
      %784 = vmatprep.subr.mxu0 0.0
      %785 = vmatpush1.msra.mxu0 0.0
      %786 = vmatprep.subr.mxu0 0.0
      %787 = vmatpush1.msra.mxu0 0.0
      %788 = vmatprep.subr.mxu0 0.0
      %789 = vmatpush1.msra.mxu0 %v501
      %790 = vmatprep.subr.mxu0 0.0
      %791 = vmatpush1.msra.mxu0 %v500
      %792 = vmatprep.subr.mxu0 0.0
      %793 = vmatpush2.msra.mxu0 0.0
      %794 = vmatprep.subr.mxu0 0.0
      %795 = vmatpush2.msra.mxu0 0.0
      %796 = vmatprep.subr.mxu0 0.0
      %797 = vmatpush2.msra.mxu0 0.0
      %798 = vmatprep.subr.mxu0 0.0
      %799 = vmatpush2.msra.mxu0 0.0
      %800 = vmatprep.subr.mxu0 0.0
      %801 = vmatpush2.msra.mxu0 0.0
      %802 = vmatprep.subr.mxu0 0.0
      %803 = vmatpush2.msra.mxu0 0.0
      %804 = vmatprep.subr.mxu0 0.0
      %805 = vmatpush2.msra.mxu0 0.0
      %806 = vmatprep.subr.mxu0 0.0
      %807 = vmatpush2.msra.mxu0 0.0
      %808 = vmatprep.subr.mxu0 0.0
      %809 = vmatpush2.msra.mxu0 0.0
      %810 = vmatprep.subr.mxu0 0.0
      %811 = vmatpush2.msra.mxu0 0.0
      %812 = vmatprep.subr.mxu0 0.0
      %813 = vmatpush2.msra.mxu0 0.0
      %814 = vmatprep.subr.mxu0 0.0
      %815 = vmatpush2.msra.mxu0 0.0
      %816 = vmatprep.subr.mxu0 0.0
      %817 = vmatpush2.msra.mxu0 0.0
      %818 = vmatprep.subr.mxu0 0.0
      %819 = vmatpush2.msra.mxu0 0.0
      %820 = vmatprep.subr.mxu0 0.0
      %821 = vmatpush2.msra.mxu0 0.0
      %822 = vmatprep.subr.mxu0 0.0
      %823 = vmatpush2.msra.mxu0 0.0
      %824 = vmatprep.mubr.f32.mxu0 0.0
      %825 = vmatmul.mubr.f32.gmra.mxu0 %v726
      %v826 = vpop.f32.mrf.mxu0
      %v827 = vadd.f32 %v643, %v826
      %v828 = vpop.f32.mrf.mxu0
      %829 = vmatprep.mubr.f32.mxu0 0.0
      %830 = vmatmul.mubr.f32.gmra.mxu0 %v728
      %v831 = vpop.f32.mrf.mxu0
      %v832 = vadd.f32 %v648, %v831
      %v833 = vpop.f32.mrf.mxu0
      %834 = vmatprep.mubr.f32.mxu0 0.0
      %835 = vmatmul.mubr.f32.gmra.mxu0 %v730
      %v836 = vpop.f32.mrf.mxu0
      %v837 = vadd.f32 %v653, %v836
      %v838 = vpop.f32.mrf.mxu0
      %839 = vmatprep.mubr.f32.mxu0 0.0
      %840 = vmatmul.mubr.f32.gmra.mxu0 %v732
      %v841 = vpop.f32.mrf.mxu0
      %v842 = vadd.f32 %v658, %v841
      %v843 = vpop.f32.mrf.mxu0
      %844 = vmatprep.mubr.f32.mxu0 0.0
      %845 = vmatmul.mubr.f32.gmra.mxu0 %v734
      %v846 = vpop.f32.mrf.mxu0
      %v847 = vadd.f32 %v663, %v846
      %v848 = vpop.f32.mrf.mxu0
      %849 = vmatprep.mubr.f32.mxu0 0.0
      %850 = vmatmul.mubr.f32.gmra.mxu0 %v736
      %v851 = vpop.f32.mrf.mxu0
      %v852 = vadd.f32 %v668, %v851
      %v853 = vpop.f32.mrf.mxu0
      %854 = vmatprep.mubr.f32.mxu0 0.0
      %855 = vmatmul.mubr.f32.gmra.mxu0 %v738
      %v856 = vpop.f32.mrf.mxu0
      %v857 = vadd.f32 %v673, %v856
      %v858 = vpop.f32.mrf.mxu0
      %859 = vmatprep.mubr.f32.mxu0 0.0
      %860 = vmatmul.mubr.f32.gmra.mxu0 %v740
      %v861 = vpop.f32.mrf.mxu0
      %v862 = vadd.f32 %v678, %v861
      %v863 = vpop.f32.mrf.mxu0
      %864 = vmatprep.mubr.f32.mxu0 0.0
      %865 = vmatmul.mubr.f32.gmra.mxu0 %v742
      %v866 = vpop.f32.mrf.mxu0
      %v867 = vadd.f32 %v683, %v866
      %v868 = vpop.f32.mrf.mxu0
      %869 = vmatprep.mubr.f32.mxu0 0.0
      %870 = vmatmul.mubr.f32.gmra.mxu0 %v744
      %v871 = vpop.f32.mrf.mxu0
      %v872 = vadd.f32 %v688, %v871
      %v873 = vpop.f32.mrf.mxu0
      %874 = vmatprep.mubr.f32.mxu0 0.0
      %875 = vmatmul.mubr.f32.gmra.mxu0 %v746
      %v876 = vpop.f32.mrf.mxu0
      %v877 = vadd.f32 %v693, %v876
      %v878 = vpop.f32.mrf.mxu0
      %879 = vmatprep.mubr.f32.mxu0 0.0
      %880 = vmatmul.mubr.f32.gmra.mxu0 %v748
      %v881 = vpop.f32.mrf.mxu0
      %v882 = vadd.f32 %v698, %v881
      %v883 = vpop.f32.mrf.mxu0
      %884 = vmatprep.mubr.f32.mxu0 0.0
      %885 = vmatmul.mubr.f32.gmra.mxu0 %v750
      %v886 = vpop.f32.mrf.mxu0
      %v887 = vadd.f32 %v703, %v886
      %v888 = vpop.f32.mrf.mxu0
      %889 = vmatprep.mubr.f32.mxu0 0.0
      %890 = vmatmul.mubr.f32.gmra.mxu0 %v752
      %v891 = vpop.f32.mrf.mxu0
      %v892 = vadd.f32 %v708, %v891
      %v893 = vpop.f32.mrf.mxu0
      %894 = vmatprep.mubr.f32.mxu0 0.0
      %895 = vmatmul.mubr.f32.gmra.mxu0 %v754
      %v896 = vpop.f32.mrf.mxu0
      %v897 = vadd.f32 %v713, %v896
      %v898 = vpop.f32.mrf.mxu0
      %899 = vmatprep.mubr.f32.mxu0 0.0
      %900 = vmatmul.mubr.f32.gmra.mxu0 %v756
      %v901 = vpop.f32.mrf.mxu0
      %v902 = vadd.f32 %v718, %v901
      %v903 = vpop.f32.mrf.mxu0
      %904 = vmatprep.mubr.f32.mxu0 0.0
      %905 = vmatmul.mubr.f32.gmra.mxu0 %v758
      %v906 = vpop.f32.mrf.mxu0
      %v907 = vadd.f32 %v723, %v906
      %v908 = vpop.f32.mrf.mxu0
      %909 = vdwg.mxu0
      %s910 = scalar_lea.vmem %s3, 32
      %v911 = vld [vmem:[%s910] sm:$0xff]
      %v912 = vld [vmem:[%s910 + $0x8] sm:$0xff]
      %vm913 = vcmask 1045504
      %v914 = vrot.slane %v498, 2
      %v915 = vrot.slane %v464, 2
      %v916 = vsel %vm913, %v914, %v915
      %v917 = vrot.slane %v466, 2
      %v918 = vsel %vm913, %v915, %v917
      %v919 = vrot.slane %v468, 2
      %v920 = vsel %vm913, %v917, %v919
      %v921 = vrot.slane %v470, 2
      %v922 = vsel %vm913, %v919, %v921
      %v923 = vrot.slane %v472, 2
      %v924 = vsel %vm913, %v921, %v923
      %v925 = vrot.slane %v474, 2
      %v926 = vsel %vm913, %v923, %v925
      %v927 = vrot.slane %v476, 2
      %v928 = vsel %vm913, %v925, %v927
      %v929 = vrot.slane %v478, 2
      %v930 = vsel %vm913, %v927, %v929
      %v931 = vrot.slane %v480, 2
      %v932 = vsel %vm913, %v929, %v931
      %v933 = vrot.slane %v482, 2
      %v934 = vsel %vm913, %v931, %v933
      %v935 = vrot.slane %v484, 2
      %v936 = vsel %vm913, %v933, %v935
      %v937 = vrot.slane %v486, 2
      %v938 = vsel %vm913, %v935, %v937
      %v939 = vrot.slane %v488, 2
      %v940 = vsel %vm913, %v937, %v939
      %v941 = vrot.slane %v490, 2
      %v942 = vsel %vm913, %v939, %v941
      %v943 = vrot.slane %v492, 2
      %v944 = vsel %vm913, %v941, %v943
      %v945 = vrot.slane %v499, 2
      %v946 = vsel %vm913, %v943, %v945
      %v947 = vsel %vm541, %v916, 0
      %v949 = vsel %vm541, %v918, 0
      %v951 = vsel %vm541, %v920, 0
      %v953 = vsel %vm541, %v922, 0
      %v955 = vsel %vm541, %v924, 0
      %v957 = vsel %vm541, %v926, 0
      %v959 = vsel %vm541, %v928, 0
      %v961 = vsel %vm541, %v930, 0
      %v963 = vsel %vm541, %v932, 0
      %v965 = vsel %vm541, %v934, 0
      %v967 = vsel %vm541, %v936, 0
      %v969 = vsel %vm541, %v938, 0
      %v971 = vsel %vm541, %v940, 0
      %v973 = vsel %vm541, %v942, 0
      %v975 = vsel %vm541, %v944, 0
      %v977 = vsel %vm541, %v946, 0
      %v979 = vsel %vm541, %v945, 0
      %981 = vmatprep.subr.mxu0 0.0
      %982 = vmatpush1.msra.mxu0 0.0
      %983 = vmatprep.subr.mxu0 0.0
      %984 = vmatpush1.msra.mxu0 0.0
      %985 = vmatprep.subr.mxu0 0.0
      %986 = vmatpush1.msra.mxu0 0.0
      %987 = vmatprep.subr.mxu0 0.0
      %988 = vmatpush1.msra.mxu0 0.0
      %989 = vmatprep.subr.mxu0 0.0
      %990 = vmatpush1.msra.mxu0 0.0
      %991 = vmatprep.subr.mxu0 0.0
      %992 = vmatpush1.msra.mxu0 0.0
      %993 = vmatprep.subr.mxu0 0.0
      %994 = vmatpush1.msra.mxu0 0.0
      %995 = vmatprep.subr.mxu0 0.0
      %996 = vmatpush1.msra.mxu0 0.0
      %997 = vmatprep.subr.mxu0 0.0
      %998 = vmatpush1.msra.mxu0 0.0
      %999 = vmatprep.subr.mxu0 0.0
      %1000 = vmatpush1.msra.mxu0 0.0
      %1001 = vmatprep.subr.mxu0 0.0
      %1002 = vmatpush1.msra.mxu0 0.0
      %1003 = vmatprep.subr.mxu0 0.0
      %1004 = vmatpush1.msra.mxu0 0.0
      %1005 = vmatprep.subr.mxu0 0.0
      %1006 = vmatpush1.msra.mxu0 0.0
      %1007 = vmatprep.subr.mxu0 0.0
      %1008 = vmatpush1.msra.mxu0 0.0
      %1009 = vmatprep.subr.mxu0 0.0
      %1010 = vmatpush1.msra.mxu0 %v912
      %1011 = vmatprep.subr.mxu0 0.0
      %1012 = vmatpush1.msra.mxu0 %v911
      %1013 = vmatprep.subr.mxu0 0.0
      %1014 = vmatpush2.msra.mxu0 0.0
      %1015 = vmatprep.subr.mxu0 0.0
      %1016 = vmatpush2.msra.mxu0 0.0
      %1017 = vmatprep.subr.mxu0 0.0
      %1018 = vmatpush2.msra.mxu0 0.0
      %1019 = vmatprep.subr.mxu0 0.0
      %1020 = vmatpush2.msra.mxu0 0.0
      %1021 = vmatprep.subr.mxu0 0.0
      %1022 = vmatpush2.msra.mxu0 0.0
      %1023 = vmatprep.subr.mxu0 0.0
      %1024 = vmatpush2.msra.mxu0 0.0
      %1025 = vmatprep.subr.mxu0 0.0
      %1026 = vmatpush2.msra.mxu0 0.0
      %1027 = vmatprep.subr.mxu0 0.0
      %1028 = vmatpush2.msra.mxu0 0.0
      %1029 = vmatprep.subr.mxu0 0.0
      %1030 = vmatpush2.msra.mxu0 0.0
      %1031 = vmatprep.subr.mxu0 0.0
      %1032 = vmatpush2.msra.mxu0 0.0
      %1033 = vmatprep.subr.mxu0 0.0
      %1034 = vmatpush2.msra.mxu0 0.0
      %1035 = vmatprep.subr.mxu0 0.0
      %1036 = vmatpush2.msra.mxu0 0.0
      %1037 = vmatprep.subr.mxu0 0.0
      %1038 = vmatpush2.msra.mxu0 0.0
      %1039 = vmatprep.subr.mxu0 0.0
      %1040 = vmatpush2.msra.mxu0 0.0
      %1041 = vmatprep.subr.mxu0 0.0
      %1042 = vmatpush2.msra.mxu0 0.0
      %1043 = vmatprep.subr.mxu0 0.0
      %1044 = vmatpush2.msra.mxu0 0.0
      %1045 = vmatprep.mubr.f32.mxu0 0.0
      %1046 = vmatmul.mubr.f32.gmra.mxu0 %v947
      %v1047 = vpop.f32.mrf.mxu0
      %v1048 = vadd.f32 0.0, %v1047
      %v1049 = vpop.f32.mrf.mxu0
      %1050 = vmatprep.mubr.f32.mxu0 0.0
      %1051 = vmatmul.mubr.f32.gmra.mxu0 %v949
      %v1052 = vpop.f32.mrf.mxu0
      %v1053 = vadd.f32 0.0, %v1052
      %v1054 = vpop.f32.mrf.mxu0
      %1055 = vmatprep.mubr.f32.mxu0 0.0
      %1056 = vmatmul.mubr.f32.gmra.mxu0 %v951
      %v1057 = vpop.f32.mrf.mxu0
      %v1058 = vadd.f32 0.0, %v1057
      %v1059 = vpop.f32.mrf.mxu0
      %1060 = vmatprep.mubr.f32.mxu0 0.0
      %1061 = vmatmul.mubr.f32.gmra.mxu0 %v953
      %v1062 = vpop.f32.mrf.mxu0
      %v1063 = vadd.f32 0.0, %v1062
      %v1064 = vpop.f32.mrf.mxu0
      %1065 = vmatprep.mubr.f32.mxu0 0.0
      %1066 = vmatmul.mubr.f32.gmra.mxu0 %v955
      %v1067 = vpop.f32.mrf.mxu0
      %v1068 = vadd.f32 0.0, %v1067
      %v1069 = vpop.f32.mrf.mxu0
      %1070 = vmatprep.mubr.f32.mxu0 0.0
      %1071 = vmatmul.mubr.f32.gmra.mxu0 %v957
      %v1072 = vpop.f32.mrf.mxu0
      %v1073 = vadd.f32 0.0, %v1072
      %v1074 = vpop.f32.mrf.mxu0
      %1075 = vmatprep.mubr.f32.mxu0 0.0
      %1076 = vmatmul.mubr.f32.gmra.mxu0 %v959
      %v1077 = vpop.f32.mrf.mxu0
      %v1078 = vadd.f32 0.0, %v1077
      %v1079 = vpop.f32.mrf.mxu0
      %1080 = vmatprep.mubr.f32.mxu0 0.0
      %1081 = vmatmul.mubr.f32.gmra.mxu0 %v961
      %v1082 = vpop.f32.mrf.mxu0
      %v1083 = vadd.f32 0.0, %v1082
      %v1084 = vpop.f32.mrf.mxu0
      %1085 = vmatprep.mubr.f32.mxu0 0.0
      %1086 = vmatmul.mubr.f32.gmra.mxu0 %v963
      %v1087 = vpop.f32.mrf.mxu0
      %v1088 = vadd.f32 0.0, %v1087
      %v1089 = vpop.f32.mrf.mxu0
      %1090 = vmatprep.mubr.f32.mxu0 0.0
      %1091 = vmatmul.mubr.f32.gmra.mxu0 %v965
      %v1092 = vpop.f32.mrf.mxu0
      %v1093 = vadd.f32 0.0, %v1092
      %v1094 = vpop.f32.mrf.mxu0
      %1095 = vmatprep.mubr.f32.mxu0 0.0
      %1096 = vmatmul.mubr.f32.gmra.mxu0 %v967
      %v1097 = vpop.f32.mrf.mxu0
      %v1098 = vadd.f32 0.0, %v1097
      %v1099 = vpop.f32.mrf.mxu0
      %1100 = vmatprep.mubr.f32.mxu0 0.0
      %1101 = vmatmul.mubr.f32.gmra.mxu0 %v969
      %v1102 = vpop.f32.mrf.mxu0
      %v1103 = vadd.f32 0.0, %v1102
      %v1104 = vpop.f32.mrf.mxu0
      %1105 = vmatprep.mubr.f32.mxu0 0.0
      %1106 = vmatmul.mubr.f32.gmra.mxu0 %v971
      %v1107 = vpop.f32.mrf.mxu0
      %v1108 = vadd.f32 0.0, %v1107
      %v1109 = vpop.f32.mrf.mxu0
      %1110 = vmatprep.mubr.f32.mxu0 0.0
      %1111 = vmatmul.mubr.f32.gmra.mxu0 %v973
      %v1112 = vpop.f32.mrf.mxu0
      %v1113 = vadd.f32 0.0, %v1112
      %v1114 = vpop.f32.mrf.mxu0
      %1115 = vmatprep.mubr.f32.mxu0 0.0
      %1116 = vmatmul.mubr.f32.gmra.mxu0 %v975
      %v1117 = vpop.f32.mrf.mxu0
      %v1118 = vadd.f32 0.0, %v1117
      %v1119 = vpop.f32.mrf.mxu0
      %1120 = vmatprep.mubr.f32.mxu0 0.0
      %1121 = vmatmul.mubr.f32.gmra.mxu0 %v977
      %v1122 = vpop.f32.mrf.mxu0
      %v1123 = vadd.f32 0.0, %v1122
      %v1124 = vpop.f32.mrf.mxu0
      %1125 = vmatprep.mubr.f32.mxu0 0.0
      %1126 = vmatmul.mubr.f32.gmra.mxu0 %v979
      %v1127 = vpop.f32.mrf.mxu0
      %v1128 = vadd.f32 0.0, %v1127
      %v1129 = vpop.f32.mrf.mxu0
      %1130 = vdwg.mxu0
      %v1131 = vadd.f32 %v827, %v1048
      %v1132 = vadd.f32 %v832, %v1053
      %v1133 = vadd.f32 %v837, %v1058
      %v1134 = vadd.f32 %v842, %v1063
      %v1135 = vadd.f32 %v847, %v1068
      %v1136 = vadd.f32 %v852, %v1073
      %v1137 = vadd.f32 %v857, %v1078
      %v1138 = vadd.f32 %v862, %v1083
      %v1139 = vadd.f32 %v867, %v1088
      %v1140 = vadd.f32 %v872, %v1093
      %v1141 = vadd.f32 %v877, %v1098
      %v1142 = vadd.f32 %v882, %v1103
      %v1143 = vadd.f32 %v887, %v1108
      %v1144 = vadd.f32 %v892, %v1113
      %v1145 = vadd.f32 %v897, %v1118
      %v1146 = vadd.f32 %v902, %v1123
      %v1147 = vadd.f32 %v907, %v1128
      %v1148 = vlaneseq
      %v1149 = vshrl.u32 %v1148, 7
      %v1150 = vsub.s32 0, %v1149
      %v1151 = vrot.slane %v426, %v1150
      %v1152 = vadd.f32 %v1131, %v1151
      %v1153 = vadd.f32 %v1132, %v1151
      %v1154 = vadd.f32 %v1133, %v1151
      %v1155 = vadd.f32 %v1134, %v1151
      %v1156 = vadd.f32 %v1135, %v1151
      %v1157 = vadd.f32 %v1136, %v1151
      %v1158 = vadd.f32 %v1137, %v1151
      %v1159 = vadd.f32 %v1138, %v1151
      %v1160 = vadd.f32 %v1139, %v1151
      %v1161 = vadd.f32 %v1140, %v1151
      %v1162 = vadd.f32 %v1141, %v1151
      %v1163 = vadd.f32 %v1142, %v1151
      %v1164 = vadd.f32 %v1143, %v1151
      %v1165 = vadd.f32 %v1144, %v1151
      %v1166 = vadd.f32 %v1145, %v1151
      %v1167 = vadd.f32 %v1146, %v1151
      %v1168 = vadd.f32 %v1147, %v1151
      %vm1169 = vcmp.ge.f32.partialorder %v1152, 0.0
      %vm1170 = vcmp.ge.f32.partialorder %v1153, 0.0
      %vm1171 = vcmp.ge.f32.partialorder %v1154, 0.0
      %vm1172 = vcmp.ge.f32.partialorder %v1155, 0.0
      %vm1173 = vcmp.ge.f32.partialorder %v1156, 0.0
      %vm1174 = vcmp.ge.f32.partialorder %v1157, 0.0
      %vm1175 = vcmp.ge.f32.partialorder %v1158, 0.0
      %vm1176 = vcmp.ge.f32.partialorder %v1159, 0.0
      %vm1177 = vcmp.ge.f32.partialorder %v1160, 0.0
      %vm1178 = vcmp.ge.f32.partialorder %v1161, 0.0
      %vm1179 = vcmp.ge.f32.partialorder %v1162, 0.0
      %vm1180 = vcmp.ge.f32.partialorder %v1163, 0.0
      %vm1181 = vcmp.ge.f32.partialorder %v1164, 0.0
      %vm1182 = vcmp.ge.f32.partialorder %v1165, 0.0
      %vm1183 = vcmp.ge.f32.partialorder %v1166, 0.0
      %vm1184 = vcmp.ge.f32.partialorder %v1167, 0.0
      %vm1185 = vcmp.ge.f32.partialorder %v1168, 0.0
      %v1186 = vlaneseq
      %v1187 = vshrl.u32 %v1186, 7
      %v1188 = vsub.s32 1, %v1187
      %v1189 = vrot.slane %v426, %v1188
      %v1190 = vmul.f32 %v1189, %v1152
      %v1191 = vmul.f32 %v1189, %v1153
      %v1192 = vmul.f32 %v1189, %v1154
      %v1193 = vmul.f32 %v1189, %v1155
      %v1194 = vmul.f32 %v1189, %v1156
      %v1195 = vmul.f32 %v1189, %v1157
      %v1196 = vmul.f32 %v1189, %v1158
      %v1197 = vmul.f32 %v1189, %v1159
      %v1198 = vmul.f32 %v1189, %v1160
      %v1199 = vmul.f32 %v1189, %v1161
      %v1200 = vmul.f32 %v1189, %v1162
      %v1201 = vmul.f32 %v1189, %v1163
      %v1202 = vmul.f32 %v1189, %v1164
      %v1203 = vmul.f32 %v1189, %v1165
      %v1204 = vmul.f32 %v1189, %v1166
      %v1205 = vmul.f32 %v1189, %v1167
      %v1206 = vmul.f32 %v1189, %v1168
      %v1207 = vsel %vm1169, %v1152, %v1190
      %v1208 = vsel %vm1170, %v1153, %v1191
      %v1209 = vsel %vm1171, %v1154, %v1192
      %v1210 = vsel %vm1172, %v1155, %v1193
      %v1211 = vsel %vm1173, %v1156, %v1194
      %v1212 = vsel %vm1174, %v1157, %v1195
      %v1213 = vsel %vm1175, %v1158, %v1196
      %v1214 = vsel %vm1176, %v1159, %v1197
      %v1215 = vsel %vm1177, %v1160, %v1198
      %v1216 = vsel %vm1178, %v1161, %v1199
      %v1217 = vsel %vm1179, %v1162, %v1200
      %v1218 = vsel %vm1180, %v1163, %v1201
      %v1219 = vsel %vm1181, %v1164, %v1202
      %v1220 = vsel %vm1182, %v1165, %v1203
      %v1221 = vsel %vm1183, %v1166, %v1204
      %v1222 = vsel %vm1184, %v1167, %v1205
      %v1223 = vsel %vm1185, %v1168, %v1206
      %s1224 = ssub.s32 %s409, 1
      %v1225 = vadd.s32 %v431, 8
      %v1226 = vadd.s32 %v431, 16
      %v1227 = vadd.s32 %v431, 24
      %v1228 = vadd.s32 %v431, 32
      %v1229 = vadd.s32 %v431, 40
      %v1230 = vadd.s32 %v431, 48
      %v1231 = vadd.s32 %v431, 56
      %v1232 = vadd.s32 %v431, 64
      %v1233 = vadd.s32 %v431, 72
      %v1234 = vadd.s32 %v431, 80
      %v1235 = vadd.s32 %v431, 88
      %v1236 = vadd.s32 %v431, 96
      %v1237 = vadd.s32 %v431, 104
      %v1238 = vadd.s32 %v431, 112
      %v1239 = vadd.s32 %v431, 120
      %v1240 = vadd.s32 %v431, 128
      %v1241 = vstv %s1224
      %v1242 = vadd.s32 %v1241, %v431
      %v1243 = vadd.s32 %v1241, %v1225
      %v1244 = vadd.s32 %v1241, %v1226
      %v1245 = vadd.s32 %v1241, %v1227
      %v1246 = vadd.s32 %v1241, %v1228
      %v1247 = vadd.s32 %v1241, %v1229
      %v1248 = vadd.s32 %v1241, %v1230
      %v1249 = vadd.s32 %v1241, %v1231
      %v1250 = vadd.s32 %v1241, %v1232
      %v1251 = vadd.s32 %v1241, %v1233
      %v1252 = vadd.s32 %v1241, %v1234
      %v1253 = vadd.s32 %v1241, %v1235
      %v1254 = vadd.s32 %v1241, %v1236
      %v1255 = vadd.s32 %v1241, %v1237
      %v1256 = vadd.s32 %v1241, %v1238
      %v1257 = vadd.s32 %v1241, %v1239
      %v1258 = vadd.s32 %v1241, %v1240
      %vm1259 = vcmp.ge.s32.totalorder %v1242, 0
      %vm1260 = vcmp.ge.s32.totalorder %v1243, 0
      %vm1261 = vcmp.ge.s32.totalorder %v1244, 0
      %vm1262 = vcmp.ge.s32.totalorder %v1245, 0
      %vm1263 = vcmp.ge.s32.totalorder %v1246, 0
      %vm1264 = vcmp.ge.s32.totalorder %v1247, 0
      %vm1265 = vcmp.ge.s32.totalorder %v1248, 0
      %vm1266 = vcmp.ge.s32.totalorder %v1249, 0
      %vm1267 = vcmp.ge.s32.totalorder %v1250, 0
      %vm1268 = vcmp.ge.s32.totalorder %v1251, 0
      %vm1269 = vcmp.ge.s32.totalorder %v1252, 0
      %vm1270 = vcmp.ge.s32.totalorder %v1253, 0
      %vm1271 = vcmp.ge.s32.totalorder %v1254, 0
      %vm1272 = vcmp.ge.s32.totalorder %v1255, 0
      %vm1273 = vcmp.ge.s32.totalorder %v1256, 0
      %vm1274 = vcmp.ge.s32.totalorder %v1257, 0
      %vm1275 = vcmp.ge.s32.totalorder %v1258, 0
      %vm1276 = vcmp.lt.s32.totalorder %v1242, 256
      %vm1277 = vcmp.lt.s32.totalorder %v1243, 256
      %vm1278 = vcmp.lt.s32.totalorder %v1244, 256
      %vm1279 = vcmp.lt.s32.totalorder %v1245, 256
      %vm1280 = vcmp.lt.s32.totalorder %v1246, 256
      %vm1281 = vcmp.lt.s32.totalorder %v1247, 256
      %vm1282 = vcmp.lt.s32.totalorder %v1248, 256
      %vm1283 = vcmp.lt.s32.totalorder %v1249, 256
      %vm1284 = vcmp.lt.s32.totalorder %v1250, 256
      %vm1285 = vcmp.lt.s32.totalorder %v1251, 256
      %vm1286 = vcmp.lt.s32.totalorder %v1252, 256
      %vm1287 = vcmp.lt.s32.totalorder %v1253, 256
      %vm1288 = vcmp.lt.s32.totalorder %v1254, 256
      %vm1289 = vcmp.lt.s32.totalorder %v1255, 256
      %vm1290 = vcmp.lt.s32.totalorder %v1256, 256
      %vm1291 = vcmp.lt.s32.totalorder %v1257, 256
      %vm1292 = vcmp.lt.s32.totalorder %v1258, 256
      %vm1293 = vmand %vm1259, %vm1276
      %vm1294 = vmand %vm1260, %vm1277
      %vm1295 = vmand %vm1261, %vm1278
      %vm1296 = vmand %vm1262, %vm1279
      %vm1297 = vmand %vm1263, %vm1280
      %vm1298 = vmand %vm1264, %vm1281
      %vm1299 = vmand %vm1265, %vm1282
      %vm1300 = vmand %vm1266, %vm1283
      %vm1301 = vmand %vm1267, %vm1284
      %vm1302 = vmand %vm1268, %vm1285
      %vm1303 = vmand %vm1269, %vm1286
      %vm1304 = vmand %vm1270, %vm1287
      %vm1305 = vmand %vm1271, %vm1288
      %vm1306 = vmand %vm1272, %vm1289
      %vm1307 = vmand %vm1273, %vm1290
      %vm1308 = vmand %vm1274, %vm1291
      %vm1309 = vmand %vm1275, %vm1292
      %v1310 = vsel %vm1293, 1, 0
      %v1311 = vsel %vm1294, 1, 0
      %v1312 = vsel %vm1295, 1, 0
      %v1313 = vsel %vm1296, 1, 0
      %v1314 = vsel %vm1297, 1, 0
      %v1315 = vsel %vm1298, 1, 0
      %v1316 = vsel %vm1299, 1, 0
      %v1317 = vsel %vm1300, 1, 0
      %v1318 = vsel %vm1301, 1, 0
      %v1319 = vsel %vm1302, 1, 0
      %v1320 = vsel %vm1303, 1, 0
      %v1321 = vsel %vm1304, 1, 0
      %v1322 = vsel %vm1305, 1, 0
      %v1323 = vsel %vm1306, 1, 0
      %v1324 = vsel %vm1307, 1, 0
      %v1325 = vsel %vm1308, 1, 0
      %v1326 = vsel %vm1309, 1, 0
      %vm1327 = vcmp.eq.s32.totalorder %v1310, 1
      %vm1328 = vcmp.eq.s32.totalorder %v1311, 1
      %vm1329 = vcmp.eq.s32.totalorder %v1312, 1
      %vm1330 = vcmp.eq.s32.totalorder %v1313, 1
      %vm1331 = vcmp.eq.s32.totalorder %v1314, 1
      %vm1332 = vcmp.eq.s32.totalorder %v1315, 1
      %vm1333 = vcmp.eq.s32.totalorder %v1316, 1
      %vm1334 = vcmp.eq.s32.totalorder %v1317, 1
      %vm1335 = vcmp.eq.s32.totalorder %v1318, 1
      %vm1336 = vcmp.eq.s32.totalorder %v1319, 1
      %vm1337 = vcmp.eq.s32.totalorder %v1320, 1
      %vm1338 = vcmp.eq.s32.totalorder %v1321, 1
      %vm1339 = vcmp.eq.s32.totalorder %v1322, 1
      %vm1340 = vcmp.eq.s32.totalorder %v1323, 1
      %vm1341 = vcmp.eq.s32.totalorder %v1324, 1
      %vm1342 = vcmp.eq.s32.totalorder %v1325, 1
      %vm1343 = vcmp.eq.s32.totalorder %v1326, 1
      %v1344 = vsel %vm1327, %v1207, 0.0
      %v1345 = vsel %vm1328, %v1208, 0.0
      %v1346 = vsel %vm1329, %v1209, 0.0
      %v1347 = vsel %vm1330, %v1210, 0.0
      %v1348 = vsel %vm1331, %v1211, 0.0
      %v1349 = vsel %vm1332, %v1212, 0.0
      %v1350 = vsel %vm1333, %v1213, 0.0
      %v1351 = vsel %vm1334, %v1214, 0.0
      %v1352 = vsel %vm1335, %v1215, 0.0
      %v1353 = vsel %vm1336, %v1216, 0.0
      %v1354 = vsel %vm1337, %v1217, 0.0
      %v1355 = vsel %vm1338, %v1218, 0.0
      %v1356 = vsel %vm1339, %v1219, 0.0
      %v1357 = vsel %vm1340, %v1220, 0.0
      %v1358 = vsel %vm1341, %v1221, 0.0
      %v1359 = vsel %vm1342, %v1222, 0.0
      %v1360 = vsel %vm1343, %v1223, 0.0
      %v1361 = vld [vmem:[%s4] sm:$0xff]
      %v1362 = vld [vmem:[%s4 + $0x8] sm:$0xff]
      %s1363 = scalar_lea.vmem %s4, 16
      %v1364 = vld [vmem:[%s1363] sm:$0xff]
      %v1365 = vld [vmem:[%s1363 + $0x8] sm:$0xff]
      %v1383 = vrot.slane %v1344, 1
      %v1384 = vrot.slane %v1345, 1
      %v1385 = vsel %vm507, %v1383, %v1384
      %v1386 = vrot.slane %v1346, 1
      %v1387 = vsel %vm507, %v1384, %v1386
      %v1388 = vrot.slane %v1347, 1
      %v1389 = vsel %vm507, %v1386, %v1388
      %v1390 = vrot.slane %v1348, 1
      %v1391 = vsel %vm507, %v1388, %v1390
      %v1392 = vrot.slane %v1349, 1
      %v1393 = vsel %vm507, %v1390, %v1392
      %v1394 = vrot.slane %v1350, 1
      %v1395 = vsel %vm507, %v1392, %v1394
      %v1396 = vrot.slane %v1351, 1
      %v1397 = vsel %vm507, %v1394, %v1396
      %v1398 = vrot.slane %v1352, 1
      %v1399 = vsel %vm507, %v1396, %v1398
      %v1400 = vrot.slane %v1353, 1
      %v1401 = vsel %vm507, %v1398, %v1400
      %v1402 = vrot.slane %v1354, 1
      %v1403 = vsel %vm507, %v1400, %v1402
      %v1404 = vrot.slane %v1355, 1
      %v1405 = vsel %vm507, %v1402, %v1404
      %v1406 = vrot.slane %v1356, 1
      %v1407 = vsel %vm507, %v1404, %v1406
      %v1408 = vrot.slane %v1357, 1
      %v1409 = vsel %vm507, %v1406, %v1408
      %v1410 = vrot.slane %v1358, 1
      %v1411 = vsel %vm507, %v1408, %v1410
      %v1412 = vrot.slane %v1359, 1
      %v1413 = vsel %vm507, %v1410, %v1412
      %v1414 = vrot.slane %v1360, 1
      %v1415 = vsel %vm507, %v1412, %v1414
      %v1416 = vsel %vm541, %v1385, 0
      %v1418 = vsel %vm541, %v1387, 0
      %v1420 = vsel %vm541, %v1389, 0
      %v1422 = vsel %vm541, %v1391, 0
      %v1424 = vsel %vm541, %v1393, 0
      %v1426 = vsel %vm541, %v1395, 0
      %v1428 = vsel %vm541, %v1397, 0
      %v1430 = vsel %vm541, %v1399, 0
      %v1432 = vsel %vm541, %v1401, 0
      %v1434 = vsel %vm541, %v1403, 0
      %v1436 = vsel %vm541, %v1405, 0
      %v1438 = vsel %vm541, %v1407, 0
      %v1440 = vsel %vm541, %v1409, 0
      %v1442 = vsel %vm541, %v1411, 0
      %v1444 = vsel %vm541, %v1413, 0
      %v1446 = vsel %vm541, %v1415, 0
      %1448 = vmatprep.subr.mxu0 0.0
      %1449 = vmatpush1.msra.mxu0 0.0
      %1450 = vmatprep.subr.mxu0 0.0
      %1451 = vmatpush1.msra.mxu0 0.0
      %1452 = vmatprep.subr.mxu0 0.0
      %1453 = vmatpush1.msra.mxu0 0.0
      %1454 = vmatprep.subr.mxu0 0.0
      %1455 = vmatpush1.msra.mxu0 0.0
      %1456 = vmatprep.subr.mxu0 0.0
      %1457 = vmatpush1.msra.mxu0 0.0
      %1458 = vmatprep.subr.mxu0 0.0
      %1459 = vmatpush1.msra.mxu0 0.0
      %1460 = vmatprep.subr.mxu0 0.0
      %1461 = vmatpush1.msra.mxu0 0.0
      %1462 = vmatprep.subr.mxu0 0.0
      %1463 = vmatpush1.msra.mxu0 0.0
      %1464 = vmatprep.subr.mxu0 0.0
      %1465 = vmatpush1.msra.mxu0 0.0
      %1466 = vmatprep.subr.mxu0 0.0
      %1467 = vmatpush1.msra.mxu0 0.0
      %1468 = vmatprep.subr.mxu0 0.0
      %1469 = vmatpush1.msra.mxu0 0.0
      %1470 = vmatprep.subr.mxu0 0.0
      %1471 = vmatpush1.msra.mxu0 0.0
      %1472 = vmatprep.subr.mxu0 0.0
      %1473 = vmatpush1.msra.mxu0 0.0
      %1474 = vmatprep.subr.mxu0 0.0
      %1475 = vmatpush1.msra.mxu0 0.0
      %1476 = vmatprep.subr.mxu0 0.0
      %1477 = vmatpush1.msra.mxu0 %v1365
      %1478 = vmatprep.subr.mxu0 0.0
      %1479 = vmatpush1.msra.mxu0 %v1364
      %1480 = vmatprep.subr.mxu0 0.0
      %1481 = vmatpush2.msra.mxu0 0.0
      %1482 = vmatprep.subr.mxu0 0.0
      %1483 = vmatpush2.msra.mxu0 0.0
      %1484 = vmatprep.subr.mxu0 0.0
      %1485 = vmatpush2.msra.mxu0 0.0
      %1486 = vmatprep.subr.mxu0 0.0
      %1487 = vmatpush2.msra.mxu0 0.0
      %1488 = vmatprep.subr.mxu0 0.0
      %1489 = vmatpush2.msra.mxu0 0.0
      %1490 = vmatprep.subr.mxu0 0.0
      %1491 = vmatpush2.msra.mxu0 0.0
      %1492 = vmatprep.subr.mxu0 0.0
      %1493 = vmatpush2.msra.mxu0 0.0
      %1494 = vmatprep.subr.mxu0 0.0
      %1495 = vmatpush2.msra.mxu0 0.0
      %1496 = vmatprep.subr.mxu0 0.0
      %1497 = vmatpush2.msra.mxu0 0.0
      %1498 = vmatprep.subr.mxu0 0.0
      %1499 = vmatpush2.msra.mxu0 0.0
      %1500 = vmatprep.subr.mxu0 0.0
      %1501 = vmatpush2.msra.mxu0 0.0
      %1502 = vmatprep.subr.mxu0 0.0
      %1503 = vmatpush2.msra.mxu0 0.0
      %1504 = vmatprep.subr.mxu0 0.0
      %1505 = vmatpush2.msra.mxu0 0.0
      %1506 = vmatprep.subr.mxu0 0.0
      %1507 = vmatpush2.msra.mxu0 0.0
      %1508 = vmatprep.subr.mxu0 0.0
      %1509 = vmatpush2.msra.mxu0 0.0
      %1510 = vmatprep.subr.mxu0 0.0
      %1511 = vmatpush2.msra.mxu0 0.0
      %1512 = vmatprep.mubr.f32.mxu0 0.0
      %1513 = vmatmul.mubr.f32.gmra.mxu0 %v1416
      %v1514 = vpop.f32.mrf.mxu0
      %v1515 = vadd.f32 0.0, %v1514
      %v1516 = vpop.f32.mrf.mxu0
      %1517 = vmatprep.mubr.f32.mxu0 0.0
      %1518 = vmatmul.mubr.f32.gmra.mxu0 %v1418
      %v1519 = vpop.f32.mrf.mxu0
      %v1520 = vadd.f32 0.0, %v1519
      %v1521 = vpop.f32.mrf.mxu0
      %1522 = vmatprep.mubr.f32.mxu0 0.0
      %1523 = vmatmul.mubr.f32.gmra.mxu0 %v1420
      %v1524 = vpop.f32.mrf.mxu0
      %v1525 = vadd.f32 0.0, %v1524
      %v1526 = vpop.f32.mrf.mxu0
      %1527 = vmatprep.mubr.f32.mxu0 0.0
      %1528 = vmatmul.mubr.f32.gmra.mxu0 %v1422
      %v1529 = vpop.f32.mrf.mxu0
      %v1530 = vadd.f32 0.0, %v1529
      %v1531 = vpop.f32.mrf.mxu0
      %1532 = vmatprep.mubr.f32.mxu0 0.0
      %1533 = vmatmul.mubr.f32.gmra.mxu0 %v1424
      %v1534 = vpop.f32.mrf.mxu0
      %v1535 = vadd.f32 0.0, %v1534
      %v1536 = vpop.f32.mrf.mxu0
      %1537 = vmatprep.mubr.f32.mxu0 0.0
      %1538 = vmatmul.mubr.f32.gmra.mxu0 %v1426
      %v1539 = vpop.f32.mrf.mxu0
      %v1540 = vadd.f32 0.0, %v1539
      %v1541 = vpop.f32.mrf.mxu0
      %1542 = vmatprep.mubr.f32.mxu0 0.0
      %1543 = vmatmul.mubr.f32.gmra.mxu0 %v1428
      %v1544 = vpop.f32.mrf.mxu0
      %v1545 = vadd.f32 0.0, %v1544
      %v1546 = vpop.f32.mrf.mxu0
      %1547 = vmatprep.mubr.f32.mxu0 0.0
      %1548 = vmatmul.mubr.f32.gmra.mxu0 %v1430
      %v1549 = vpop.f32.mrf.mxu0
      %v1550 = vadd.f32 0.0, %v1549
      %v1551 = vpop.f32.mrf.mxu0
      %1552 = vmatprep.mubr.f32.mxu0 0.0
      %1553 = vmatmul.mubr.f32.gmra.mxu0 %v1432
      %v1554 = vpop.f32.mrf.mxu0
      %v1555 = vadd.f32 0.0, %v1554
      %v1556 = vpop.f32.mrf.mxu0
      %1557 = vmatprep.mubr.f32.mxu0 0.0
      %1558 = vmatmul.mubr.f32.gmra.mxu0 %v1434
      %v1559 = vpop.f32.mrf.mxu0
      %v1560 = vadd.f32 0.0, %v1559
      %v1561 = vpop.f32.mrf.mxu0
      %1562 = vmatprep.mubr.f32.mxu0 0.0
      %1563 = vmatmul.mubr.f32.gmra.mxu0 %v1436
      %v1564 = vpop.f32.mrf.mxu0
      %v1565 = vadd.f32 0.0, %v1564
      %v1566 = vpop.f32.mrf.mxu0
      %1567 = vmatprep.mubr.f32.mxu0 0.0
      %1568 = vmatmul.mubr.f32.gmra.mxu0 %v1438
      %v1569 = vpop.f32.mrf.mxu0
      %v1570 = vadd.f32 0.0, %v1569
      %v1571 = vpop.f32.mrf.mxu0
      %1572 = vmatprep.mubr.f32.mxu0 0.0
      %1573 = vmatmul.mubr.f32.gmra.mxu0 %v1440
      %v1574 = vpop.f32.mrf.mxu0
      %v1575 = vadd.f32 0.0, %v1574
      %v1576 = vpop.f32.mrf.mxu0
      %1577 = vmatprep.mubr.f32.mxu0 0.0
      %1578 = vmatmul.mubr.f32.gmra.mxu0 %v1442
      %v1579 = vpop.f32.mrf.mxu0
      %v1580 = vadd.f32 0.0, %v1579
      %v1581 = vpop.f32.mrf.mxu0
      %1582 = vmatprep.mubr.f32.mxu0 0.0
      %1583 = vmatmul.mubr.f32.gmra.mxu0 %v1444
      %v1584 = vpop.f32.mrf.mxu0
      %v1585 = vadd.f32 0.0, %v1584
      %v1586 = vpop.f32.mrf.mxu0
      %1587 = vmatprep.mubr.f32.mxu0 0.0
      %1588 = vmatmul.mubr.f32.gmra.mxu0 %v1446
      %v1589 = vpop.f32.mrf.mxu0
      %v1590 = vadd.f32 0.0, %v1589
      %v1591 = vpop.f32.mrf.mxu0
      %1592 = vdwg.mxu0
      %v1593 = vsel %vm541, %v1344, 0
      %v1595 = vsel %vm541, %v1345, 0
      %v1597 = vsel %vm541, %v1346, 0
      %v1599 = vsel %vm541, %v1347, 0
      %v1601 = vsel %vm541, %v1348, 0
      %v1603 = vsel %vm541, %v1349, 0
      %v1605 = vsel %vm541, %v1350, 0
      %v1607 = vsel %vm541, %v1351, 0
      %v1609 = vsel %vm541, %v1352, 0
      %v1611 = vsel %vm541, %v1353, 0
      %v1613 = vsel %vm541, %v1354, 0
      %v1615 = vsel %vm541, %v1355, 0
      %v1617 = vsel %vm541, %v1356, 0
      %v1619 = vsel %vm541, %v1357, 0
      %v1621 = vsel %vm541, %v1358, 0
      %v1623 = vsel %vm541, %v1359, 0
      %1625 = vmatprep.subr.mxu0 0.0
      %1626 = vmatpush1.msra.mxu0 0.0
      %1627 = vmatprep.subr.mxu0 0.0
      %1628 = vmatpush1.msra.mxu0 0.0
      %1629 = vmatprep.subr.mxu0 0.0
      %1630 = vmatpush1.msra.mxu0 0.0
      %1631 = vmatprep.subr.mxu0 0.0
      %1632 = vmatpush1.msra.mxu0 0.0
      %1633 = vmatprep.subr.mxu0 0.0
      %1634 = vmatpush1.msra.mxu0 0.0
      %1635 = vmatprep.subr.mxu0 0.0
      %1636 = vmatpush1.msra.mxu0 0.0
      %1637 = vmatprep.subr.mxu0 0.0
      %1638 = vmatpush1.msra.mxu0 0.0
      %1639 = vmatprep.subr.mxu0 0.0
      %1640 = vmatpush1.msra.mxu0 0.0
      %1641 = vmatprep.subr.mxu0 0.0
      %1642 = vmatpush1.msra.mxu0 0.0
      %1643 = vmatprep.subr.mxu0 0.0
      %1644 = vmatpush1.msra.mxu0 0.0
      %1645 = vmatprep.subr.mxu0 0.0
      %1646 = vmatpush1.msra.mxu0 0.0
      %1647 = vmatprep.subr.mxu0 0.0
      %1648 = vmatpush1.msra.mxu0 0.0
      %1649 = vmatprep.subr.mxu0 0.0
      %1650 = vmatpush1.msra.mxu0 0.0
      %1651 = vmatprep.subr.mxu0 0.0
      %1652 = vmatpush1.msra.mxu0 0.0
      %1653 = vmatprep.subr.mxu0 0.0
      %1654 = vmatpush1.msra.mxu0 %v1362
      %1655 = vmatprep.subr.mxu0 0.0
      %1656 = vmatpush1.msra.mxu0 %v1361
      %1657 = vmatprep.subr.mxu0 0.0
      %1658 = vmatpush2.msra.mxu0 0.0
      %1659 = vmatprep.subr.mxu0 0.0
      %1660 = vmatpush2.msra.mxu0 0.0
      %1661 = vmatprep.subr.mxu0 0.0
      %1662 = vmatpush2.msra.mxu0 0.0
      %1663 = vmatprep.subr.mxu0 0.0
      %1664 = vmatpush2.msra.mxu0 0.0
      %1665 = vmatprep.subr.mxu0 0.0
      %1666 = vmatpush2.msra.mxu0 0.0
      %1667 = vmatprep.subr.mxu0 0.0
      %1668 = vmatpush2.msra.mxu0 0.0
      %1669 = vmatprep.subr.mxu0 0.0
      %1670 = vmatpush2.msra.mxu0 0.0
      %1671 = vmatprep.subr.mxu0 0.0
      %1672 = vmatpush2.msra.mxu0 0.0
      %1673 = vmatprep.subr.mxu0 0.0
      %1674 = vmatpush2.msra.mxu0 0.0
      %1675 = vmatprep.subr.mxu0 0.0
      %1676 = vmatpush2.msra.mxu0 0.0
      %1677 = vmatprep.subr.mxu0 0.0
      %1678 = vmatpush2.msra.mxu0 0.0
      %1679 = vmatprep.subr.mxu0 0.0
      %1680 = vmatpush2.msra.mxu0 0.0
      %1681 = vmatprep.subr.mxu0 0.0
      %1682 = vmatpush2.msra.mxu0 0.0
      %1683 = vmatprep.subr.mxu0 0.0
      %1684 = vmatpush2.msra.mxu0 0.0
      %1685 = vmatprep.subr.mxu0 0.0
      %1686 = vmatpush2.msra.mxu0 0.0
      %1687 = vmatprep.subr.mxu0 0.0
      %1688 = vmatpush2.msra.mxu0 0.0
      %1689 = vmatprep.mubr.f32.mxu0 0.0
      %1690 = vmatmul.mubr.f32.gmra.mxu0 %v1593
      %v1691 = vpop.f32.mrf.mxu0
      %v1692 = vadd.f32 %v1515, %v1691
      %v1693 = vpop.f32.mrf.mxu0
      %1694 = vmatprep.mubr.f32.mxu0 0.0
      %1695 = vmatmul.mubr.f32.gmra.mxu0 %v1595
      %v1696 = vpop.f32.mrf.mxu0
      %v1697 = vadd.f32 %v1520, %v1696
      %v1698 = vpop.f32.mrf.mxu0
      %1699 = vmatprep.mubr.f32.mxu0 0.0
      %1700 = vmatmul.mubr.f32.gmra.mxu0 %v1597
      %v1701 = vpop.f32.mrf.mxu0
      %v1702 = vadd.f32 %v1525, %v1701
      %v1703 = vpop.f32.mrf.mxu0
      %1704 = vmatprep.mubr.f32.mxu0 0.0
      %1705 = vmatmul.mubr.f32.gmra.mxu0 %v1599
      %v1706 = vpop.f32.mrf.mxu0
      %v1707 = vadd.f32 %v1530, %v1706
      %v1708 = vpop.f32.mrf.mxu0
      %1709 = vmatprep.mubr.f32.mxu0 0.0
      %1710 = vmatmul.mubr.f32.gmra.mxu0 %v1601
      %v1711 = vpop.f32.mrf.mxu0
      %v1712 = vadd.f32 %v1535, %v1711
      %v1713 = vpop.f32.mrf.mxu0
      %1714 = vmatprep.mubr.f32.mxu0 0.0
      %1715 = vmatmul.mubr.f32.gmra.mxu0 %v1603
      %v1716 = vpop.f32.mrf.mxu0
      %v1717 = vadd.f32 %v1540, %v1716
      %v1718 = vpop.f32.mrf.mxu0
      %1719 = vmatprep.mubr.f32.mxu0 0.0
      %1720 = vmatmul.mubr.f32.gmra.mxu0 %v1605
      %v1721 = vpop.f32.mrf.mxu0
      %v1722 = vadd.f32 %v1545, %v1721
      %v1723 = vpop.f32.mrf.mxu0
      %1724 = vmatprep.mubr.f32.mxu0 0.0
      %1725 = vmatmul.mubr.f32.gmra.mxu0 %v1607
      %v1726 = vpop.f32.mrf.mxu0
      %v1727 = vadd.f32 %v1550, %v1726
      %v1728 = vpop.f32.mrf.mxu0
      %1729 = vmatprep.mubr.f32.mxu0 0.0
      %1730 = vmatmul.mubr.f32.gmra.mxu0 %v1609
      %v1731 = vpop.f32.mrf.mxu0
      %v1732 = vadd.f32 %v1555, %v1731
      %v1733 = vpop.f32.mrf.mxu0
      %1734 = vmatprep.mubr.f32.mxu0 0.0
      %1735 = vmatmul.mubr.f32.gmra.mxu0 %v1611
      %v1736 = vpop.f32.mrf.mxu0
      %v1737 = vadd.f32 %v1560, %v1736
      %v1738 = vpop.f32.mrf.mxu0
      %1739 = vmatprep.mubr.f32.mxu0 0.0
      %1740 = vmatmul.mubr.f32.gmra.mxu0 %v1613
      %v1741 = vpop.f32.mrf.mxu0
      %v1742 = vadd.f32 %v1565, %v1741
      %v1743 = vpop.f32.mrf.mxu0
      %1744 = vmatprep.mubr.f32.mxu0 0.0
      %1745 = vmatmul.mubr.f32.gmra.mxu0 %v1615
      %v1746 = vpop.f32.mrf.mxu0
      %v1747 = vadd.f32 %v1570, %v1746
      %v1748 = vpop.f32.mrf.mxu0
      %1749 = vmatprep.mubr.f32.mxu0 0.0
      %1750 = vmatmul.mubr.f32.gmra.mxu0 %v1617
      %v1751 = vpop.f32.mrf.mxu0
      %v1752 = vadd.f32 %v1575, %v1751
      %v1753 = vpop.f32.mrf.mxu0
      %1754 = vmatprep.mubr.f32.mxu0 0.0
      %1755 = vmatmul.mubr.f32.gmra.mxu0 %v1619
      %v1756 = vpop.f32.mrf.mxu0
      %v1757 = vadd.f32 %v1580, %v1756
      %v1758 = vpop.f32.mrf.mxu0
      %1759 = vmatprep.mubr.f32.mxu0 0.0
      %1760 = vmatmul.mubr.f32.gmra.mxu0 %v1621
      %v1761 = vpop.f32.mrf.mxu0
      %v1762 = vadd.f32 %v1585, %v1761
      %v1763 = vpop.f32.mrf.mxu0
      %1764 = vmatprep.mubr.f32.mxu0 0.0
      %1765 = vmatmul.mubr.f32.gmra.mxu0 %v1623
      %v1766 = vpop.f32.mrf.mxu0
      %v1767 = vadd.f32 %v1590, %v1766
      %v1768 = vpop.f32.mrf.mxu0
      %1769 = vdwg.mxu0
      %s1770 = scalar_lea.vmem %s4, 32
      %v1771 = vld [vmem:[%s1770] sm:$0xff]
      %v1772 = vld [vmem:[%s1770 + $0x8] sm:$0xff]
      %v1773 = vrot.slane %v1344, 2
      %v1774 = vrot.slane %v1345, 2
      %v1775 = vsel %vm913, %v1773, %v1774
      %v1776 = vrot.slane %v1346, 2
      %v1777 = vsel %vm913, %v1774, %v1776
      %v1778 = vrot.slane %v1347, 2
      %v1779 = vsel %vm913, %v1776, %v1778
      %v1780 = vrot.slane %v1348, 2
      %v1781 = vsel %vm913, %v1778, %v1780
      %v1782 = vrot.slane %v1349, 2
      %v1783 = vsel %vm913, %v1780, %v1782
      %v1784 = vrot.slane %v1350, 2
      %v1785 = vsel %vm913, %v1782, %v1784
      %v1786 = vrot.slane %v1351, 2
      %v1787 = vsel %vm913, %v1784, %v1786
      %v1788 = vrot.slane %v1352, 2
      %v1789 = vsel %vm913, %v1786, %v1788
      %v1790 = vrot.slane %v1353, 2
      %v1791 = vsel %vm913, %v1788, %v1790
      %v1792 = vrot.slane %v1354, 2
      %v1793 = vsel %vm913, %v1790, %v1792
      %v1794 = vrot.slane %v1355, 2
      %v1795 = vsel %vm913, %v1792, %v1794
      %v1796 = vrot.slane %v1356, 2
      %v1797 = vsel %vm913, %v1794, %v1796
      %v1798 = vrot.slane %v1357, 2
      %v1799 = vsel %vm913, %v1796, %v1798
      %v1800 = vrot.slane %v1358, 2
      %v1801 = vsel %vm913, %v1798, %v1800
      %v1802 = vrot.slane %v1359, 2
      %v1803 = vsel %vm913, %v1800, %v1802
      %v1804 = vrot.slane %v1360, 2
      %v1805 = vsel %vm913, %v1802, %v1804
      %v1806 = vsel %vm541, %v1775, 0
      %v1808 = vsel %vm541, %v1777, 0
      %v1810 = vsel %vm541, %v1779, 0
      %v1812 = vsel %vm541, %v1781, 0
      %v1814 = vsel %vm541, %v1783, 0
      %v1816 = vsel %vm541, %v1785, 0
      %v1818 = vsel %vm541, %v1787, 0
      %v1820 = vsel %vm541, %v1789, 0
      %v1822 = vsel %vm541, %v1791, 0
      %v1824 = vsel %vm541, %v1793, 0
      %v1826 = vsel %vm541, %v1795, 0
      %v1828 = vsel %vm541, %v1797, 0
      %v1830 = vsel %vm541, %v1799, 0
      %v1832 = vsel %vm541, %v1801, 0
      %v1834 = vsel %vm541, %v1803, 0
      %v1836 = vsel %vm541, %v1805, 0
      %1838 = vmatprep.subr.mxu0 0.0
      %1839 = vmatpush1.msra.mxu0 0.0
      %1840 = vmatprep.subr.mxu0 0.0
      %1841 = vmatpush1.msra.mxu0 0.0
      %1842 = vmatprep.subr.mxu0 0.0
      %1843 = vmatpush1.msra.mxu0 0.0
      %1844 = vmatprep.subr.mxu0 0.0
      %1845 = vmatpush1.msra.mxu0 0.0
      %1846 = vmatprep.subr.mxu0 0.0
      %1847 = vmatpush1.msra.mxu0 0.0
      %1848 = vmatprep.subr.mxu0 0.0
      %1849 = vmatpush1.msra.mxu0 0.0
      %1850 = vmatprep.subr.mxu0 0.0
      %1851 = vmatpush1.msra.mxu0 0.0
      %1852 = vmatprep.subr.mxu0 0.0
      %1853 = vmatpush1.msra.mxu0 0.0
      %1854 = vmatprep.subr.mxu0 0.0
      %1855 = vmatpush1.msra.mxu0 0.0
      %1856 = vmatprep.subr.mxu0 0.0
      %1857 = vmatpush1.msra.mxu0 0.0
      %1858 = vmatprep.subr.mxu0 0.0
      %1859 = vmatpush1.msra.mxu0 0.0
      %1860 = vmatprep.subr.mxu0 0.0
      %1861 = vmatpush1.msra.mxu0 0.0
      %1862 = vmatprep.subr.mxu0 0.0
      %1863 = vmatpush1.msra.mxu0 0.0
      %1864 = vmatprep.subr.mxu0 0.0
      %1865 = vmatpush1.msra.mxu0 0.0
      %1866 = vmatprep.subr.mxu0 0.0
      %1867 = vmatpush1.msra.mxu0 %v1772
      %1868 = vmatprep.subr.mxu0 0.0
      %1869 = vmatpush1.msra.mxu0 %v1771
      %1870 = vmatprep.subr.mxu0 0.0
      %1871 = vmatpush2.msra.mxu0 0.0
      %1872 = vmatprep.subr.mxu0 0.0
      %1873 = vmatpush2.msra.mxu0 0.0
      %1874 = vmatprep.subr.mxu0 0.0
      %1875 = vmatpush2.msra.mxu0 0.0
      %1876 = vmatprep.subr.mxu0 0.0
      %1877 = vmatpush2.msra.mxu0 0.0
      %1878 = vmatprep.subr.mxu0 0.0
      %1879 = vmatpush2.msra.mxu0 0.0
      %1880 = vmatprep.subr.mxu0 0.0
      %1881 = vmatpush2.msra.mxu0 0.0
      %1882 = vmatprep.subr.mxu0 0.0
      %1883 = vmatpush2.msra.mxu0 0.0
      %1884 = vmatprep.subr.mxu0 0.0
      %1885 = vmatpush2.msra.mxu0 0.0
      %1886 = vmatprep.subr.mxu0 0.0
      %1887 = vmatpush2.msra.mxu0 0.0
      %1888 = vmatprep.subr.mxu0 0.0
      %1889 = vmatpush2.msra.mxu0 0.0
      %1890 = vmatprep.subr.mxu0 0.0
      %1891 = vmatpush2.msra.mxu0 0.0
      %1892 = vmatprep.subr.mxu0 0.0
      %1893 = vmatpush2.msra.mxu0 0.0
      %1894 = vmatprep.subr.mxu0 0.0
      %1895 = vmatpush2.msra.mxu0 0.0
      %1896 = vmatprep.subr.mxu0 0.0
      %1897 = vmatpush2.msra.mxu0 0.0
      %1898 = vmatprep.subr.mxu0 0.0
      %1899 = vmatpush2.msra.mxu0 0.0
      %1900 = vmatprep.subr.mxu0 0.0
      %1901 = vmatpush2.msra.mxu0 0.0
      %1902 = vmatprep.mubr.f32.mxu0 0.0
      %1903 = vmatmul.mubr.f32.gmra.mxu0 %v1806
      %v1904 = vpop.f32.mrf.mxu0
      %v1905 = vadd.f32 0.0, %v1904
      %v1906 = vpop.f32.mrf.mxu0
      %1907 = vmatprep.mubr.f32.mxu0 0.0
      %1908 = vmatmul.mubr.f32.gmra.mxu0 %v1808
      %v1909 = vpop.f32.mrf.mxu0
      %v1910 = vadd.f32 0.0, %v1909
      %v1911 = vpop.f32.mrf.mxu0
      %1912 = vmatprep.mubr.f32.mxu0 0.0
      %1913 = vmatmul.mubr.f32.gmra.mxu0 %v1810
      %v1914 = vpop.f32.mrf.mxu0
      %v1915 = vadd.f32 0.0, %v1914
      %v1916 = vpop.f32.mrf.mxu0
      %1917 = vmatprep.mubr.f32.mxu0 0.0
      %1918 = vmatmul.mubr.f32.gmra.mxu0 %v1812
      %v1919 = vpop.f32.mrf.mxu0
      %v1920 = vadd.f32 0.0, %v1919
      %v1921 = vpop.f32.mrf.mxu0
      %1922 = vmatprep.mubr.f32.mxu0 0.0
      %1923 = vmatmul.mubr.f32.gmra.mxu0 %v1814
      %v1924 = vpop.f32.mrf.mxu0
      %v1925 = vadd.f32 0.0, %v1924
      %v1926 = vpop.f32.mrf.mxu0
      %1927 = vmatprep.mubr.f32.mxu0 0.0
      %1928 = vmatmul.mubr.f32.gmra.mxu0 %v1816
      %v1929 = vpop.f32.mrf.mxu0
      %v1930 = vadd.f32 0.0, %v1929
      %v1931 = vpop.f32.mrf.mxu0
      %1932 = vmatprep.mubr.f32.mxu0 0.0
      %1933 = vmatmul.mubr.f32.gmra.mxu0 %v1818
      %v1934 = vpop.f32.mrf.mxu0
      %v1935 = vadd.f32 0.0, %v1934
      %v1936 = vpop.f32.mrf.mxu0
      %1937 = vmatprep.mubr.f32.mxu0 0.0
      %1938 = vmatmul.mubr.f32.gmra.mxu0 %v1820
      %v1939 = vpop.f32.mrf.mxu0
      %v1940 = vadd.f32 0.0, %v1939
      %v1941 = vpop.f32.mrf.mxu0
      %1942 = vmatprep.mubr.f32.mxu0 0.0
      %1943 = vmatmul.mubr.f32.gmra.mxu0 %v1822
      %v1944 = vpop.f32.mrf.mxu0
      %v1945 = vadd.f32 0.0, %v1944
      %v1946 = vpop.f32.mrf.mxu0
      %1947 = vmatprep.mubr.f32.mxu0 0.0
      %1948 = vmatmul.mubr.f32.gmra.mxu0 %v1824
      %v1949 = vpop.f32.mrf.mxu0
      %v1950 = vadd.f32 0.0, %v1949
      %v1951 = vpop.f32.mrf.mxu0
      %1952 = vmatprep.mubr.f32.mxu0 0.0
      %1953 = vmatmul.mubr.f32.gmra.mxu0 %v1826
      %v1954 = vpop.f32.mrf.mxu0
      %v1955 = vadd.f32 0.0, %v1954
      %v1956 = vpop.f32.mrf.mxu0
      %1957 = vmatprep.mubr.f32.mxu0 0.0
      %1958 = vmatmul.mubr.f32.gmra.mxu0 %v1828
      %v1959 = vpop.f32.mrf.mxu0
      %v1960 = vadd.f32 0.0, %v1959
      %v1961 = vpop.f32.mrf.mxu0
      %1962 = vmatprep.mubr.f32.mxu0 0.0
      %1963 = vmatmul.mubr.f32.gmra.mxu0 %v1830
      %v1964 = vpop.f32.mrf.mxu0
      %v1965 = vadd.f32 0.0, %v1964
      %v1966 = vpop.f32.mrf.mxu0
      %1967 = vmatprep.mubr.f32.mxu0 0.0
      %1968 = vmatmul.mubr.f32.gmra.mxu0 %v1832
      %v1969 = vpop.f32.mrf.mxu0
      %v1970 = vadd.f32 0.0, %v1969
      %v1971 = vpop.f32.mrf.mxu0
      %1972 = vmatprep.mubr.f32.mxu0 0.0
      %1973 = vmatmul.mubr.f32.gmra.mxu0 %v1834
      %v1974 = vpop.f32.mrf.mxu0
      %v1975 = vadd.f32 0.0, %v1974
      %v1976 = vpop.f32.mrf.mxu0
      %1977 = vmatprep.mubr.f32.mxu0 0.0
      %1978 = vmatmul.mubr.f32.gmra.mxu0 %v1836
      %v1979 = vpop.f32.mrf.mxu0
      %v1980 = vadd.f32 0.0, %v1979
      %v1981 = vpop.f32.mrf.mxu0
      %1982 = vdwg.mxu0
      %v1983 = vadd.f32 %v1692, %v1905
      %v1984 = vadd.f32 %v1697, %v1910
      %v1985 = vadd.f32 %v1702, %v1915
      %v1986 = vadd.f32 %v1707, %v1920
      %v1987 = vadd.f32 %v1712, %v1925
      %v1988 = vadd.f32 %v1717, %v1930
      %v1989 = vadd.f32 %v1722, %v1935
      %v1990 = vadd.f32 %v1727, %v1940
      %v1991 = vadd.f32 %v1732, %v1945
      %v1992 = vadd.f32 %v1737, %v1950
      %v1993 = vadd.f32 %v1742, %v1955
      %v1994 = vadd.f32 %v1747, %v1960
      %v1995 = vadd.f32 %v1752, %v1965
      %v1996 = vadd.f32 %v1757, %v1970
      %v1997 = vadd.f32 %v1762, %v1975
      %v1998 = vadd.f32 %v1767, %v1980
      %v1999 = vlaneseq
      %v2000 = vshrl.u32 %v1999, 7
      %v2001 = vsub.s32 2, %v2000
      %v2002 = vrot.slane %v426, %v2001
      %v2003 = vadd.f32 %v1983, %v2002
      %v2004 = vadd.f32 %v1984, %v2002
      %v2005 = vadd.f32 %v1985, %v2002
      %v2006 = vadd.f32 %v1986, %v2002
      %v2007 = vadd.f32 %v1987, %v2002
      %v2008 = vadd.f32 %v1988, %v2002
      %v2009 = vadd.f32 %v1989, %v2002
      %v2010 = vadd.f32 %v1990, %v2002
      %v2011 = vadd.f32 %v1991, %v2002
      %v2012 = vadd.f32 %v1992, %v2002
      %v2013 = vadd.f32 %v1993, %v2002
      %v2014 = vadd.f32 %v1994, %v2002
      %v2015 = vadd.f32 %v1995, %v2002
      %v2016 = vadd.f32 %v1996, %v2002
      %v2017 = vadd.f32 %v1997, %v2002
      %v2018 = vadd.f32 %v1998, %v2002
      %v2019 = vadd.f32 %v410, %v2003
      %v2020 = vadd.f32 %v411, %v2004
      %v2021 = vadd.f32 %v412, %v2005
      %v2022 = vadd.f32 %v413, %v2006
      %v2023 = vadd.f32 %v414, %v2007
      %v2024 = vadd.f32 %v415, %v2008
      %v2025 = vadd.f32 %v416, %v2009
      %v2026 = vadd.f32 %v417, %v2010
      %v2027 = vadd.f32 %v418, %v2011
      %v2028 = vadd.f32 %v419, %v2012
      %v2029 = vadd.f32 %v420, %v2013
      %v2030 = vadd.f32 %v421, %v2014
      %v2031 = vadd.f32 %v422, %v2015
      %v2032 = vadd.f32 %v423, %v2016
      %v2033 = vadd.f32 %v424, %v2017
      %v2034 = vadd.f32 %v425, %v2018
      %vm2035 = vcmp.ge.f32.partialorder %v2019, 0.0
      %vm2036 = vcmp.ge.f32.partialorder %v2020, 0.0
      %vm2037 = vcmp.ge.f32.partialorder %v2021, 0.0
      %vm2038 = vcmp.ge.f32.partialorder %v2022, 0.0
      %vm2039 = vcmp.ge.f32.partialorder %v2023, 0.0
      %vm2040 = vcmp.ge.f32.partialorder %v2024, 0.0
      %vm2041 = vcmp.ge.f32.partialorder %v2025, 0.0
      %vm2042 = vcmp.ge.f32.partialorder %v2026, 0.0
      %vm2043 = vcmp.ge.f32.partialorder %v2027, 0.0
      %vm2044 = vcmp.ge.f32.partialorder %v2028, 0.0
      %vm2045 = vcmp.ge.f32.partialorder %v2029, 0.0
      %vm2046 = vcmp.ge.f32.partialorder %v2030, 0.0
      %vm2047 = vcmp.ge.f32.partialorder %v2031, 0.0
      %vm2048 = vcmp.ge.f32.partialorder %v2032, 0.0
      %vm2049 = vcmp.ge.f32.partialorder %v2033, 0.0
      %vm2050 = vcmp.ge.f32.partialorder %v2034, 0.0
      %v2051 = vmul.f32 %v2019, 0.22916667
      %v2052 = vmul.f32 %v2020, 0.22916667
      %v2053 = vmul.f32 %v2021, 0.22916667
      %v2054 = vmul.f32 %v2022, 0.22916667
      %v2055 = vmul.f32 %v2023, 0.22916667
      %v2056 = vmul.f32 %v2024, 0.22916667
      %v2057 = vmul.f32 %v2025, 0.22916667
      %v2058 = vmul.f32 %v2026, 0.22916667
      %v2059 = vmul.f32 %v2027, 0.22916667
      %v2060 = vmul.f32 %v2028, 0.22916667
      %v2061 = vmul.f32 %v2029, 0.22916667
      %v2062 = vmul.f32 %v2030, 0.22916667
      %v2063 = vmul.f32 %v2031, 0.22916667
      %v2064 = vmul.f32 %v2032, 0.22916667
      %v2065 = vmul.f32 %v2033, 0.22916667
      %v2066 = vmul.f32 %v2034, 0.22916667
      %v2067 = vsel %vm2035, %v2019, %v2051
      %v2068 = vsel %vm2036, %v2020, %v2052
      %v2069 = vsel %vm2037, %v2021, %v2053
      %v2070 = vsel %vm2038, %v2022, %v2054
      %v2071 = vsel %vm2039, %v2023, %v2055
      %v2072 = vsel %vm2040, %v2024, %v2056
      %v2073 = vsel %vm2041, %v2025, %v2057
      %v2074 = vsel %vm2042, %v2026, %v2058
      %v2075 = vsel %vm2043, %v2027, %v2059
      %v2076 = vsel %vm2044, %v2028, %v2060
      %v2077 = vsel %vm2045, %v2029, %v2061
      %v2078 = vsel %vm2046, %v2030, %v2062
      %v2079 = vsel %vm2047, %v2031, %v2063
      %v2080 = vsel %vm2048, %v2032, %v2064
      %v2081 = vsel %vm2049, %v2033, %v2065
      %v2082 = vsel %vm2050, %v2034, %v2066
      %2083 = vst.msk [vmem:[%s407] sm:$0xff] %vm541, %v2067
      %2084 = vst.msk [vmem:[%s407 + $0x8] sm:$0xff] %vm541, %v2068
      %2085 = vst.msk [vmem:[%s407 + $0x10] sm:$0xff] %vm541, %v2069
      %2086 = vst.msk [vmem:[%s407 + $0x18] sm:$0xff] %vm541, %v2070
      %2087 = vst.msk [vmem:[%s407 + $0x20] sm:$0xff] %vm541, %v2071
      %2088 = vst.msk [vmem:[%s407 + $0x28] sm:$0xff] %vm541, %v2072
      %2089 = vst.msk [vmem:[%s407 + $0x30] sm:$0xff] %vm541, %v2073
      %2090 = vst.msk [vmem:[%s407 + $0x38] sm:$0xff] %vm541, %v2074
      %2091 = vst.msk [vmem:[%s407 + $0x40] sm:$0xff] %vm541, %v2075
      %2092 = vst.msk [vmem:[%s407 + $0x48] sm:$0xff] %vm541, %v2076
      %2093 = vst.msk [vmem:[%s407 + $0x50] sm:$0xff] %vm541, %v2077
      %2094 = vst.msk [vmem:[%s407 + $0x58] sm:$0xff] %vm541, %v2078
      %2095 = vst.msk [vmem:[%s407 + $0x60] sm:$0xff] %vm541, %v2079
      %2096 = vst.msk [vmem:[%s407 + $0x68] sm:$0xff] %vm541, %v2080
      %2097 = vst.msk [vmem:[%s407 + $0x70] sm:$0xff] %vm541, %v2081
      %2098 = vst.msk [vmem:[%s407 + $0x78] sm:$0xff] %vm541, %v2082
      %s2099 = smul.u32 16, %s22
      %p2100 = scmp.lt.s32.totalorder %s21, 1
      %s2101 = scalar_select %p2100, %s21, 1
      %p2102 = scmp.lt.s32.totalorder %s2099, 31
      %s2103 = scalar_select %p2102, %s2099, 31
      %s2104 = smul.addr %s2101, 32
      %s2105 = sadd.s32 %s2103, %s2104
      %s2106 = smul.addr %s2105, 8
      %s2107 = scalar_lea.vmem %s6, %s2106
      // Predicated region
      $region45: #{tpu_custom_call.1} parent=43 // pred_check
        %p2108 = pneg %p212
      $region46: #{tpu_custom_call.1} parent=43 // pred_check_branch
        %2110 = sbr.rel (%p2108) target = $region48
      $region47: #{tpu_custom_call.1} parent=43 // pred_region
        %s2111 = smul.u32 16, %s22
      $region48: #{tpu_custom_call.1} parent=43 // pred_fallthru
        _
    $region44: #{tpu_custom_call.1} parent=5 // pred_fallthru
      _
    %p2112 = scmp.le.s32.totalorder 2, %s12
    // Predicated region
    $region49: #{tpu_custom_call.1} parent=5 // pred_check
      %p2113 = pneg %p2112
    $region50: #{tpu_custom_call.1} parent=5 // pred_check_branch
      %2115 = sbr.rel (%p2113) target = $region52
    $region51: #{tpu_custom_call.1} parent=5 // pred_region
      %s2116 = ssub.s32 %s12, 2
      // Predicated region
      $region53: #{tpu_custom_call.1} parent=51 // pred_check
        %p2117 = pneg %p218
      $region54: #{tpu_custom_call.1} parent=51 // pred_check_branch
        %2119 = sbr.rel (%p2117) target = $region56
      $region55: #{tpu_custom_call.1} parent=51 // pred_region
        %s2120 = smul.u32 16, %s24
        %p2121 = scmp.lt.s32.totalorder %s23, 1
        %s2122 = scalar_select %p2121, %s23, 1
        %p2123 = scmp.lt.s32.totalorder %s2120, 31
        %s2124 = scalar_select %p2123, %s2120, 31
        %s2125 = smul.addr %s2122, 32
        %s2126 = sadd.s32 %s2124, %s2125
        %s2127 = smul.addr %s2126, 8
        %s2128 = scalar_lea.vmem %s6, %s2127
      $region56: #{tpu_custom_call.1} parent=51 // pred_fallthru
        _
    $region52: #{tpu_custom_call.1} parent=5 // pred_fallthru
      _
  $region6: #{tpu_custom_call.1} parent=0 // loop_footer
    %s16 = sadd.s32 1, %s12
  $region7: #{tpu_custom_call.1} parent=0 // loop_footer_branch
    %11 = sbr.rel target = $region3
  $region8: #{tpu_custom_call.1} parent=0 // loop_exit
    _

</llo_original>
